<compile_context>
chip_gen: v7x
topology: tpu7x:2x2x1
jax: 0.10.0
libtpu: 0.0.40
codegen_flags: <defaults>
</compile_context>

<pallas_src>
import jax
import jax.numpy as jnp
from jax.experimental import pallas as pl
from jax.experimental.pallas import tpu as pltpu


def _divisors(n):
    return [d for d in range(1, n + 1) if n % d == 0]


def _vmem_estimate(NB, TH, W_p, L_pad, C_in, C_out_tot):
    # double-buffered input + output blocks, weights, bias (bytes)
    return (2 * NB * C_in * L_pad * 2
            + 2 * NB * C_out_tot * TH * W_p * 4
            + 2 * (9 * C_out_tot * C_in * 2 + C_out_tot * 4))


def _plan_tiles(N, H, W_p, C_in, C_out_tot, vmem_budget, lane_cap=8192):
    """Pick (TH rows per step, NB batch elems per step).

    Legality: the flat output block width TH*W_p must be the full plane (TH == H) or
    a multiple of 128.  Prefer the fewest grid steps that (a) fit the VMEM budget,
    (b) keep the per-dot lane width modest, and (c) leave >= 2 total steps so both
    v7x TensorCores get work (no effect on single-TC v5e/v6e)."""
    L_pad = (H + 3) * W_p
    ths = [th for th in _divisors(H) if th == H or (th * W_p) % 128 == 0]
    cands = [(th, nb) for th in ths for nb in _divisors(N)]

    def fits(c, cap=True):
        th, nb = c
        if _vmem_estimate(nb, th, W_p, L_pad, C_in, C_out_tot) > vmem_budget:
            return False
        return (not cap) or th * W_p <= lane_cap

    pool = ([c for c in cands if fits(c)]
            or [c for c in cands if fits(c, cap=False)]
            or [min(cands, key=lambda c: _vmem_estimate(c[1], c[0], W_p, L_pad,
                                                        C_in, C_out_tot))])
    steps = lambda c: (N // c[1]) * (H // c[0])
    multi = [c for c in pool if steps(c) >= 2]
    if multi:                      # guarantee >= 2 grid steps whenever possible
        pool = multi
    th, nb = min(pool, key=lambda c: (steps(c), -c[0]))
    return th, nb


def _make_kernel(C_in, C_out_tot, TH, W_p, NB, RT):
    LANES = TH * W_p

    def kernel(x_ref, w_ref, b_ref, o_ref):
        # x_ref: (NB, C_in, L_pad)      bf16 flat zero-padded planes (row stride W_p)
        # w_ref: (9, C_out_tot, C_in)   bf16 per-tap weights, tap order (kh, kw)
        # b_ref: (C_out_tot, 1)         f32 bias column
        # o_ref: (NB, C_out_tot, LANES) f32 conv output for TH rows x W_p columns
        if RT == 1:
            base = 0
        else:
            # legal row tiles guarantee LANES % 128 == 0 whenever RT > 1
            base = pl.multiple_of(pl.program_id(1) * LANES, 128)
        bias = b_ref[...]
        for nb in range(NB):
            acc = None
            for kh in range(3):
                for kw in range(3):
                    # tap (kh, kw) = constant lane offset into the flat padded plane
                    rhs = x_ref[nb, :, pl.ds(base + kh * W_p + kw, LANES)]
                    d = jnp.dot(w_ref[kh * 3 + kw], rhs,
                                preferred_element_type=jnp.float32)
                    acc = d if acc is None else acc + d
            o_ref[nb] = (acc + bias).astype(o_ref.dtype)

    return kernel


def upsample_block_pallas(x, weight, bias, upscale_factor=2):
    """x: (N, C_in, H, W) f32 NCHW; weight: (C_out*r^2, C_in, 3, 3); bias: (C_out*r^2,).
    Returns (N, C_out, H*r, W*r) f32 -- same semantics as Upsample_Block.forward."""
    N, C_in, H, W = x.shape
    C_out_tot = weight.shape[0]
    r = upscale_factor
    assert C_out_tot % (r * r) == 0
    C_out = C_out_tot // (r * r)

    W_p = W + 2                    # padded row width = lane stride of one image row
    L_pad = (H + 3) * W_p          # 1 top + 2 bottom pad rows: the extra bottom row
                                   # keeps the (kh=2,kw=2) tap of the last row tile in
                                   # bounds; no flat round-up (full-extent last dim)
    cdt = jnp.bfloat16             # MXU-native operands; accumulation stays f32

    try:
        vmem_cap = int(getattr(pltpu.get_tpu_info(), "vmem_capacity_bytes",
                               64 * 1024 * 1024))
    except Exception:              # robust off-TPU / interpret mode
        vmem_cap = 64 * 1024 * 1024

    TH, NB = _plan_tiles(N, H, W_p, C_in, C_out_tot, vmem_budget=vmem_cap // 2)
    RT, BG = H // TH, N // NB
    LANES = TH * W_p
    # TODO(synk): for planes where even the NB=1 full flat plane (C_in*L_pad bf16) no
    # longer fits the VMEM budget, switch the input to memory_space=pl.ANY with
    # manually DMA'd halo'd row slabs instead of the whole-plane BlockSpec.

    # glue: ONE zero pad (top 1, bottom 2, left/right 1), cast, flatten spatial.
    xflat = jnp.pad(x, ((0, 0), (0, 0), (1, 2), (1, 1))).astype(cdt).reshape(
        N, C_in, L_pad)
    # glue: per-tap weight stack (9, C_out_tot, C_in) and f32 bias column.
    w_taps = jnp.transpose(weight, (2, 3, 0, 1)).reshape(9, C_out_tot, C_in).astype(cdt)
    b_col = bias.reshape(C_out_tot, 1).astype(jnp.float32)

    est = _vmem_estimate(NB, TH, W_p, L_pad, C_in, C_out_tot)
    vmem_limit = int(min(vmem_cap, max(32 * 1024 * 1024, est + (4 << 20))))

    flops = 2 * N * C_out_tot * C_in * 9 * H * W_p + N * C_out_tot * H * W_p
    bytes_accessed = (xflat.size * 2 + w_taps.size * 2 + b_col.size * 4
                      + N * C_out_tot * H * W_p * 4)

    out_flat = pl.pallas_call(
        _make_kernel(C_in, C_out_tot, TH, W_p, NB, RT),
        out_shape=jax.ShapeDtypeStruct((N, C_out_tot, H * W_p), jnp.float32),
        grid_spec=pltpu.PrefetchScalarGridSpec(
            num_scalar_prefetch=0,
            grid=(BG, RT),
            in_specs=[
                # full flat padded planes of this batch group; block index is constant
                # across row tiles -> DMA'd once per group (no 9x im2col in HBM).
                pl.BlockSpec((NB, C_in, L_pad), lambda bg, rt: (bg, 0, 0)),
                # per-tap weights + bias: tiny, resident for the whole grid.
                pl.BlockSpec((9, C_out_tot, C_in), lambda bg, rt: (0, 0, 0)),
                pl.BlockSpec((C_out_tot, 1), lambda bg, rt: (0, 0)),
            ],
            out_specs=pl.BlockSpec((NB, C_out_tot, LANES),
                                   lambda bg, rt: (bg, 0, rt)),
        ),
        compiler_params=pltpu.CompilerParams(
            dimension_semantics=("parallel", "parallel"),
            vmem_limit_bytes=vmem_limit),
        cost_estimate=pl.CostEstimate(flops=flops, transcendentals=0,
                                      bytes_accessed=bytes_accessed),
    )(xflat, w_taps, b_col)

    # glue: free view, then ONE fused slice (drop 2 pad cols) + PixelShuffle transpose.
    c = out_flat.reshape(N, C_out, r, r, H, W_p)
    y = jnp.transpose(c[..., :W], (0, 1, 4, 2, 5, 3))
    return y.reshape(N, C_out, H * r, W * r)


def _reference(x, weight, bias, upscale_factor=2):
    # plain-JAX reference (same semantics as the PyTorch module)
    N, C_in, H, W = x.shape
    C_out_tot = weight.shape[0]
    r = upscale_factor
    c = jax.lax.conv_general_dilated(
        x, weight, window_strides=(1, 1), padding=((1, 1), (1, 1)),
        dimension_numbers=("NCHW", "OIHW", "NCHW"),
    ) + bias[None, :, None, None]
    C_out = C_out_tot // (r * r)
    y = c.reshape(N, C_out, r, r, H, W)
    y = jnp.transpose(y, (0, 1, 4, 2, 5, 3))
    return y.reshape(N, C_out, H * r, W * r)


if __name__ == "__main__":
    # Module config: Upsample_Block(in_channels=4, out_channels=4, upscale_factor=2)
    N, C_in, C_out, r = 2, 4, 4, 2
    H = W = 16
    C_out_tot = C_out * r * r  # 16

    key = jax.random.PRNGKey(0)
    kx, kw_, kb = jax.random.split(key, 3)
    x = jax.random.normal(kx, (N, C_in, H, W), dtype=jnp.float32)
    weight = 0.1 * jax.random.normal(kw_, (C_out_tot, C_in, 3, 3), dtype=jnp.float32)
    bias = 0.1 * jax.random.normal(kb, (C_out_tot,), dtype=jnp.float32)

    fn = jax.jit(upsample_block_pallas, static_argnames=("upscale_factor",))
    out = jax.block_until_ready(fn(x, weight, bias, upscale_factor=r))
    ref = jax.block_until_ready(_reference(x, weight, bias, upscale_factor=r))

    assert out.shape == (N, C_out, H * r, W * r), out.shape
    # bf16 MXU operands (f32 accumulation) -> relaxed tolerance vs the f32 reference.
    max_err = float(jnp.max(jnp.abs(out - ref)))
    assert jnp.allclose(out, ref, atol=5e-2, rtol=5e-2), max_err
    print("KERNEL_OK")
</pallas_src>

<mosaic_0001>
module attributes {stable_mosaic.version = 11 : i64} {
  func.func @kernel(%arg0: i32, %arg1: i32, %arg2: memref<1x4x342xbf16, #tpu.memory_space<vmem>>, %arg3: memref<9x16x4xbf16, #tpu.memory_space<vmem>>, %arg4: memref<16x1xf32, #tpu.memory_space<vmem>>, %arg5: memref<1x16x288xf32, #tpu.memory_space<vmem>>) attributes {dimension_semantics = [#tpu.dimension_semantics<parallel>, #tpu.dimension_semantics<parallel>], iteration_bounds = array<i64: 2, 1>, scalar_prefetch = 0 : i64, scratch_operands = 0 : i64, tpu.core_type = #tpu.core_type<tc>, window_params = [{transform_indices = @transform_0, window_bounds = array<i64: 1, 4, 342>}, {pipeline_mode = #tpu.pipeline_mode<synchronous>, transform_indices = @transform_1, window_bounds = array<i64: 9, 16, 4>}, {pipeline_mode = #tpu.pipeline_mode<synchronous>, transform_indices = @transform_2, window_bounds = array<i64: 16, 1>}, {transform_indices = @transform_3, window_bounds = array<i64: 1, 16, 288>}]} {
    %c0 = arith.constant 0 : index
    %c0_0 = arith.constant 0 : index
    %0 = vector.load %arg4[%c0, %c0_0] : memref<16x1xf32, #tpu.memory_space<vmem>>, vector<16x1xf32>
    %c0_1 = arith.constant 0 : index
    %c0_2 = arith.constant 0 : index
    %c0_3 = arith.constant 0 : index
    %1 = vector.load %arg2[%c0_1, %c0_2, %c0_3] : memref<1x4x342xbf16, #tpu.memory_space<vmem>>, vector<1x4x288xbf16>
    %2 = vector.shape_cast %1 : vector<1x4x288xbf16> to vector<4x288xbf16>
    %c0_4 = arith.constant 0 : index
    %c0_5 = arith.constant 0 : index
    %c0_6 = arith.constant 0 : index
    %3 = vector.load %arg3[%c0_4, %c0_5, %c0_6] : memref<9x16x4xbf16, #tpu.memory_space<vmem>>, vector<1x16x4xbf16>
    %4 = vector.shape_cast %3 : vector<1x16x4xbf16> to vector<16x4xbf16>
    %cst = arith.constant dense<0.000000e+00> : vector<16x288xf32>
    %5 = tpu.matmul %4, %2, %cst {dimension_numbers = #tpu.dot_dimension_numbers<[1], [0], [0], [1], [0, 0, 1, 1], [], []>} : vector<16x4xbf16>, vector<4x288xbf16>, vector<16x288xf32> -> vector<16x288xf32>
    %c0_7 = arith.constant 0 : index
    %c0_8 = arith.constant 0 : index
    %c1 = arith.constant 1 : index
    %6 = vector.load %arg2[%c0_7, %c0_8, %c1] : memref<1x4x342xbf16, #tpu.memory_space<vmem>>, vector<1x4x288xbf16>
    %7 = vector.shape_cast %6 : vector<1x4x288xbf16> to vector<4x288xbf16>
    %c1_9 = arith.constant 1 : index
    %c0_10 = arith.constant 0 : index
    %c0_11 = arith.constant 0 : index
    %8 = vector.load %arg3[%c1_9, %c0_10, %c0_11] : memref<9x16x4xbf16, #tpu.memory_space<vmem>>, vector<1x16x4xbf16>
    %9 = vector.shape_cast %8 : vector<1x16x4xbf16> to vector<16x4xbf16>
    %cst_12 = arith.constant dense<0.000000e+00> : vector<16x288xf32>
    %10 = tpu.matmul %9, %7, %cst_12 {dimension_numbers = #tpu.dot_dimension_numbers<[1], [0], [0], [1], [0, 0, 1, 1], [], []>} : vector<16x4xbf16>, vector<4x288xbf16>, vector<16x288xf32> -> vector<16x288xf32>
    %11 = arith.addf %5, %10 : vector<16x288xf32>
    %c0_13 = arith.constant 0 : index
    %c0_14 = arith.constant 0 : index
    %c2 = arith.constant 2 : index
    %12 = vector.load %arg2[%c0_13, %c0_14, %c2] : memref<1x4x342xbf16, #tpu.memory_space<vmem>>, vector<1x4x288xbf16>
    %13 = vector.shape_cast %12 : vector<1x4x288xbf16> to vector<4x288xbf16>
    %c2_15 = arith.constant 2 : index
    %c0_16 = arith.constant 0 : index
    %c0_17 = arith.constant 0 : index
    %14 = vector.load %arg3[%c2_15, %c0_16, %c0_17] : memref<9x16x4xbf16, #tpu.memory_space<vmem>>, vector<1x16x4xbf16>
    %15 = vector.shape_cast %14 : vector<1x16x4xbf16> to vector<16x4xbf16>
    %cst_18 = arith.constant dense<0.000000e+00> : vector<16x288xf32>
    %16 = tpu.matmul %15, %13, %cst_18 {dimension_numbers = #tpu.dot_dimension_numbers<[1], [0], [0], [1], [0, 0, 1, 1], [], []>} : vector<16x4xbf16>, vector<4x288xbf16>, vector<16x288xf32> -> vector<16x288xf32>
    %17 = arith.addf %11, %16 : vector<16x288xf32>
    %c0_19 = arith.constant 0 : index
    %c0_20 = arith.constant 0 : index
    %c18 = arith.constant 18 : index
    %18 = vector.load %arg2[%c0_19, %c0_20, %c18] : memref<1x4x342xbf16, #tpu.memory_space<vmem>>, vector<1x4x288xbf16>
    %19 = vector.shape_cast %18 : vector<1x4x288xbf16> to vector<4x288xbf16>
    %c3 = arith.constant 3 : index
    %c0_21 = arith.constant 0 : index
    %c0_22 = arith.constant 0 : index
    %20 = vector.load %arg3[%c3, %c0_21, %c0_22] : memref<9x16x4xbf16, #tpu.memory_space<vmem>>, vector<1x16x4xbf16>
    %21 = vector.shape_cast %20 : vector<1x16x4xbf16> to vector<16x4xbf16>
    %cst_23 = arith.constant dense<0.000000e+00> : vector<16x288xf32>
    %22 = tpu.matmul %21, %19, %cst_23 {dimension_numbers = #tpu.dot_dimension_numbers<[1], [0], [0], [1], [0, 0, 1, 1], [], []>} : vector<16x4xbf16>, vector<4x288xbf16>, vector<16x288xf32> -> vector<16x288xf32>
    %23 = arith.addf %17, %22 : vector<16x288xf32>
    %c0_24 = arith.constant 0 : index
    %c0_25 = arith.constant 0 : index
    %c19 = arith.constant 19 : index
    %24 = vector.load %arg2[%c0_24, %c0_25, %c19] : memref<1x4x342xbf16, #tpu.memory_space<vmem>>, vector<1x4x288xbf16>
    %25 = vector.shape_cast %24 : vector<1x4x288xbf16> to vector<4x288xbf16>
    %c4 = arith.constant 4 : index
    %c0_26 = arith.constant 0 : index
    %c0_27 = arith.constant 0 : index
    %26 = vector.load %arg3[%c4, %c0_26, %c0_27] : memref<9x16x4xbf16, #tpu.memory_space<vmem>>, vector<1x16x4xbf16>
    %27 = vector.shape_cast %26 : vector<1x16x4xbf16> to vector<16x4xbf16>
    %cst_28 = arith.constant dense<0.000000e+00> : vector<16x288xf32>
    %28 = tpu.matmul %27, %25, %cst_28 {dimension_numbers = #tpu.dot_dimension_numbers<[1], [0], [0], [1], [0, 0, 1, 1], [], []>} : vector<16x4xbf16>, vector<4x288xbf16>, vector<16x288xf32> -> vector<16x288xf32>
    %29 = arith.addf %23, %28 : vector<16x288xf32>
    %c0_29 = arith.constant 0 : index
    %c0_30 = arith.constant 0 : index
    %c20 = arith.constant 20 : index
    %30 = vector.load %arg2[%c0_29, %c0_30, %c20] : memref<1x4x342xbf16, #tpu.memory_space<vmem>>, vector<1x4x288xbf16>
    %31 = vector.shape_cast %30 : vector<1x4x288xbf16> to vector<4x288xbf16>
    %c5 = arith.constant 5 : index
    %c0_31 = arith.constant 0 : index
    %c0_32 = arith.constant 0 : index
    %32 = vector.load %arg3[%c5, %c0_31, %c0_32] : memref<9x16x4xbf16, #tpu.memory_space<vmem>>, vector<1x16x4xbf16>
    %33 = vector.shape_cast %32 : vector<1x16x4xbf16> to vector<16x4xbf16>
    %cst_33 = arith.constant dense<0.000000e+00> : vector<16x288xf32>
    %34 = tpu.matmul %33, %31, %cst_33 {dimension_numbers = #tpu.dot_dimension_numbers<[1], [0], [0], [1], [0, 0, 1, 1], [], []>} : vector<16x4xbf16>, vector<4x288xbf16>, vector<16x288xf32> -> vector<16x288xf32>
    %35 = arith.addf %29, %34 : vector<16x288xf32>
    %c0_34 = arith.constant 0 : index
    %c0_35 = arith.constant 0 : index
    %c36 = arith.constant 36 : index
    %36 = vector.load %arg2[%c0_34, %c0_35, %c36] : memref<1x4x342xbf16, #tpu.memory_space<vmem>>, vector<1x4x288xbf16>
    %37 = vector.shape_cast %36 : vector<1x4x288xbf16> to vector<4x288xbf16>
    %c6 = arith.constant 6 : index
    %c0_36 = arith.constant 0 : index
    %c0_37 = arith.constant 0 : index
    %38 = vector.load %arg3[%c6, %c0_36, %c0_37] : memref<9x16x4xbf16, #tpu.memory_space<vmem>>, vector<1x16x4xbf16>
    %39 = vector.shape_cast %38 : vector<1x16x4xbf16> to vector<16x4xbf16>
    %cst_38 = arith.constant dense<0.000000e+00> : vector<16x288xf32>
    %40 = tpu.matmul %39, %37, %cst_38 {dimension_numbers = #tpu.dot_dimension_numbers<[1], [0], [0], [1], [0, 0, 1, 1], [], []>} : vector<16x4xbf16>, vector<4x288xbf16>, vector<16x288xf32> -> vector<16x288xf32>
    %41 = arith.addf %35, %40 : vector<16x288xf32>
    %c0_39 = arith.constant 0 : index
    %c0_40 = arith.constant 0 : index
    %c37 = arith.constant 37 : index
    %42 = vector.load %arg2[%c0_39, %c0_40, %c37] : memref<1x4x342xbf16, #tpu.memory_space<vmem>>, vector<1x4x288xbf16>
    %43 = vector.shape_cast %42 : vector<1x4x288xbf16> to vector<4x288xbf16>
    %c7 = arith.constant 7 : index
    %c0_41 = arith.constant 0 : index
    %c0_42 = arith.constant 0 : index
    %44 = vector.load %arg3[%c7, %c0_41, %c0_42] : memref<9x16x4xbf16, #tpu.memory_space<vmem>>, vector<1x16x4xbf16>
    %45 = vector.shape_cast %44 : vector<1x16x4xbf16> to vector<16x4xbf16>
    %cst_43 = arith.constant dense<0.000000e+00> : vector<16x288xf32>
    %46 = tpu.matmul %45, %43, %cst_43 {dimension_numbers = #tpu.dot_dimension_numbers<[1], [0], [0], [1], [0, 0, 1, 1], [], []>} : vector<16x4xbf16>, vector<4x288xbf16>, vector<16x288xf32> -> vector<16x288xf32>
    %47 = arith.addf %41, %46 : vector<16x288xf32>
    %c0_44 = arith.constant 0 : index
    %c0_45 = arith.constant 0 : index
    %c38 = arith.constant 38 : index
    %48 = vector.load %arg2[%c0_44, %c0_45, %c38] : memref<1x4x342xbf16, #tpu.memory_space<vmem>>, vector<1x4x288xbf16>
    %49 = vector.shape_cast %48 : vector<1x4x288xbf16> to vector<4x288xbf16>
    %c8 = arith.constant 8 : index
    %c0_46 = arith.constant 0 : index
    %c0_47 = arith.constant 0 : index
    %50 = vector.load %arg3[%c8, %c0_46, %c0_47] : memref<9x16x4xbf16, #tpu.memory_space<vmem>>, vector<1x16x4xbf16>
    %51 = vector.shape_cast %50 : vector<1x16x4xbf16> to vector<16x4xbf16>
    %cst_48 = arith.constant dense<0.000000e+00> : vector<16x288xf32>
    %52 = tpu.matmul %51, %49, %cst_48 {dimension_numbers = #tpu.dot_dimension_numbers<[1], [0], [0], [1], [0, 0, 1, 1], [], []>} : vector<16x4xbf16>, vector<4x288xbf16>, vector<16x288xf32> -> vector<16x288xf32>
    %53 = arith.addf %47, %52 : vector<16x288xf32>
    %54 = vector.broadcast %0 : vector<16x1xf32> to vector<16x288xf32>
    %55 = arith.addf %53, %54 : vector<16x288xf32>
    %c0_49 = arith.constant 0 : index
    %c0_50 = arith.constant 0 : index
    %c0_51 = arith.constant 0 : index
    %56 = vector.load %arg5[%c0_49, %c0_50, %c0_51] : memref<1x16x288xf32, #tpu.memory_space<vmem>>, vector<1x16x288xf32>
    %57 = vector.shape_cast %56 : vector<1x16x288xf32> to vector<16x288xf32>
    %58 = vector.shape_cast %55 : vector<16x288xf32> to vector<1x16x288xf32>
    tpu.vector_store %arg5[%c0_49, %c0_50, %c0_51], %58 {strides = array<i32>} : memref<1x16x288xf32, #tpu.memory_space<vmem>>, vector<1x16x288xf32>,
    return
  }
  func.func @transform_0(%arg0: i32, %arg1: i32) -> (i32, i32, i32) {
    %c0_i32 = arith.constant 0 : i32
    %c0_i32_0 = arith.constant 0 : i32
    %c0_i32_1 = arith.constant 0 : i32
    return %arg0, %c0_i32, %c0_i32_0 : i32, i32, i32
  }
  func.func @transform_1(%arg0: i32, %arg1: i32) -> (i32, i32, i32) {
    %c0_i32 = arith.constant 0 : i32
    %c0_i32_0 = arith.constant 0 : i32
    %c0_i32_1 = arith.constant 0 : i32
    %c0_i32_2 = arith.constant 0 : i32
    return %c0_i32, %c0_i32_0, %c0_i32_1 : i32, i32, i32
  }
  func.func @transform_2(%arg0: i32, %arg1: i32) -> (i32, i32) {
    %c0_i32 = arith.constant 0 : i32
    %c0_i32_0 = arith.constant 0 : i32
    %c0_i32_1 = arith.constant 0 : i32
    return %c0_i32, %c0_i32_0 : i32, i32
  }
  func.func @transform_3(%arg0: i32, %arg1: i32) -> (i32, i32, i32) {
    %c0_i32 = arith.constant 0 : i32
    %c0_i32_0 = arith.constant 0 : i32
    return %arg0, %c0_i32, %arg1 : i32, i32, i32
  }
}

</mosaic_0001>

<llo_original>
// kernel: upsample_block_pallas.1
$region0: #{upsample_block_pallas.1}
  #allocation0 [shape = 'u32[]', space=smem, size = 0x4, offset = 0x4, fixed_abs, tag = 'smem constant byte address 0x4 - core index']
  #allocation1 [shape = 'u32[144,128]{1,0:T(1,128)}', space=vmem, size = 0x12000, scoped, tag = 'internal scratch']
  %s0 = inlined_call_operand.vmem [shape: bf16[2,4,342], index: 0, kind: input, shape index: {}]
  %s1 = inlined_call_operand.vmem [shape: bf16[9,16,4], index: 1, kind: input, shape index: {}]
  %s2 = inlined_call_operand.vmem [shape: f32[16,1], index: 2, kind: input, shape index: {}]
  %s3 = inlined_call_operand.vmem [shape: f32[2,16,288], index: 3, kind: output, shape index: {}]
  %s4 = sld [smem:[#allocation0]]
  $region45: #{upsample_block_pallas.1} parent=0
    _
  %s6 = ssub.s32 1, %s4
  %s7 = scalar_select 0, %s6, %s4
  loop: start=0, step=1, limit=4
  $region2: #{upsample_block_pallas.1} parent=0 // loop_pre_header
    _
  $region3: #{upsample_block_pallas.1} parent=0 // loop_header
    %s9 = sphi 0, %s13
    %p10 = scmp.ge.s32.totalorder %s9, 4
    %s16 = sphi 0, %s28
    %s17 = sphi 0, %s24
    %s18 = sphi 0, %s16
    %s19 = sphi 0, %s17
    %s20 = sphi 0, %s18
    %s21 = sphi 0, %s19
    %s31 = sphi 0, %s33
    %s34 = sphi 0, %s31
    %s35 = sphi 0, %s34
    %s51 = sphi 0, %s35
    %s55 = sphi 0, %s55
    %s57 = sphi 0, %s55
    %s58 = sphi 0, %s57
    %s72 = sphi 0, %s58
    %s76 = sphi 0, %s76
    %s78 = sphi 0, %s76
    %s79 = sphi 0, %s78
    %s93 = sphi 0, %s79
    %s101 = sphi 0, %s103
    %s104 = sphi 0, %s101
    %s105 = sphi 0, %s104
    %s121 = sphi 0, %s105
  $region4: #{upsample_block_pallas.1} parent=0 // loop_header_branch
    %12 = sbr.rel (%p10) target = $region8
  $region5: #{upsample_block_pallas.1} parent=0 // loop_body
    %s14 = ssub.s32 %s9, 1
    %s15 = ssub.s32 %s9, 2
    %s22 = sadd.s32 1, %s17
    %p23 = scmp.ge.s32.totalorder %s22, 1
    %s24 = scalar_select %p23, 0, %s22
    %s25 = sadd.s32 1, %s16
    %s26 = scalar_select %p23, %s25, %s16
    %p27 = scmp.ge.s32.totalorder %s26, 2
    %s28 = scalar_select %p27, 0, %s26
    %s29 = ssub.s32 %s16, %s28
    %p30 = scmp.eq.s32.totalorder %s29, 0
    %s32 = sadd.s32 %s31, 1
    %s33 = scalar_select %p30, %s31, %s32
    %p36 = pneg %p30
    %p37 = scmp.eq.s32.totalorder %s9, 1
    %p38 = por %p36, %p37
    %p39 = scmp.ne.s32.totalorder %s31, %s34
    %p40 = scmp.eq.s32.totalorder %s9, 0
    %p41 = por %p39, %p40
    %p42 = scmp.ne.s32.totalorder %s31, %s34
    %p43 = scmp.eq.s32.totalorder %s14, 1
    %p44 = por %p42, %p43
    %p45 = scmp.ne.s32.totalorder %s34, %s35
    %p46 = scmp.eq.s32.totalorder %s14, 0
    %p47 = por %p45, %p46
    %p48 = scmp.ne.s32.totalorder %s34, %s35
    %p49 = scmp.eq.s32.totalorder %s15, 1
    %p50 = por %p48, %p49
    %p52 = scmp.ne.s32.totalorder %s35, %s51
    %p53 = scmp.eq.s32.totalorder %s15, 0
    %p54 = por %p52, %p53
    %s56 = sadd.s32 %s55, 1
    %p59 = scmp.eq.s32.totalorder %s9, 1
    %p60 = scmp.ne.s32.totalorder %s55, %s57
    %p61 = scmp.eq.s32.totalorder %s9, 0
    %p62 = por %p60, %p61
    %p63 = scmp.ne.s32.totalorder %s55, %s57
    %p64 = scmp.eq.s32.totalorder %s14, 1
    %p65 = por %p63, %p64
    %p66 = scmp.ne.s32.totalorder %s57, %s58
    %p67 = scmp.eq.s32.totalorder %s14, 0
    %p68 = por %p66, %p67
    %p69 = scmp.ne.s32.totalorder %s57, %s58
    %p70 = scmp.eq.s32.totalorder %s15, 1
    %p71 = por %p69, %p70
    %p73 = scmp.ne.s32.totalorder %s58, %s72
    %p74 = scmp.eq.s32.totalorder %s15, 0
    %p75 = por %p73, %p74
    %s77 = sadd.s32 %s76, 1
    %p80 = scmp.eq.s32.totalorder %s9, 1
    %p81 = scmp.ne.s32.totalorder %s76, %s78
    %p82 = scmp.eq.s32.totalorder %s9, 0
    %p83 = por %p81, %p82
    %p84 = scmp.ne.s32.totalorder %s76, %s78
    %p85 = scmp.eq.s32.totalorder %s14, 1
    %p86 = por %p84, %p85
    %p87 = scmp.ne.s32.totalorder %s78, %s79
    %p88 = scmp.eq.s32.totalorder %s14, 0
    %p89 = por %p87, %p88
    %p90 = scmp.ne.s32.totalorder %s78, %s79
    %p91 = scmp.eq.s32.totalorder %s15, 1
    %p92 = por %p90, %p91
    %p94 = scmp.ne.s32.totalorder %s79, %s93
    %p95 = scmp.eq.s32.totalorder %s15, 0
    %p96 = por %p94, %p95
    %s97 = ssub.s32 %s16, %s28
    %s98 = ssub.s32 %s17, %s24
    %s99 = sor.u32 %s97, %s98
    %p100 = scmp.eq.s32.totalorder %s99, 0
    %s102 = sadd.s32 %s101, 1
    %s103 = scalar_select %p100, %s101, %s102
    %p106 = pneg %p100
    %p107 = scmp.eq.s32.totalorder %s9, 1
    %p108 = por %p106, %p107
    %p109 = scmp.ne.s32.totalorder %s101, %s104
    %p110 = scmp.eq.s32.totalorder %s9, 0
    %p111 = por %p109, %p110
    %p112 = scmp.ne.s32.totalorder %s101, %s104
    %p113 = scmp.eq.s32.totalorder %s14, 1
    %p114 = por %p112, %p113
    %p115 = scmp.ne.s32.totalorder %s104, %s105
    %p116 = scmp.eq.s32.totalorder %s14, 0
    %p117 = por %p115, %p116
    %p118 = scmp.ne.s32.totalorder %s104, %s105
    %p119 = scmp.eq.s32.totalorder %s15, 1
    %p120 = por %p118, %p119
    %p122 = scmp.ne.s32.totalorder %s105, %s121
    %p123 = scmp.eq.s32.totalorder %s15, 0
    %p124 = por %p122, %p123
    %p125 = scmp.le.s32.totalorder 1, %s9
    %p126 = scmp.lt.s32.totalorder %s9, 3
    %p127 = pnand %p125, %p126
    %p128 = pneg %p127
    // Predicated region
    $region9: #{upsample_block_pallas.1} parent=5 // pred_check
      _
    $region10: #{upsample_block_pallas.1} parent=5 // pred_check_branch
      %130 = sbr.rel (%p127) target = $region12
    $region11: #{upsample_block_pallas.1} parent=5 // pred_region
      %s131 = ssub.s32 %s9, 1
      // Predicated region
      $region13: #{upsample_block_pallas.1} parent=11 // pred_check
        %p132 = pneg %p68
      $region14: #{upsample_block_pallas.1} parent=11 // pred_check_branch
        %134 = sbr.rel (%p132) target = $region16
      $region15: #{upsample_block_pallas.1} parent=11 // pred_region
        _
      $region16: #{upsample_block_pallas.1} parent=11 // pred_fallthru
        _
      // Predicated region
      $region17: #{upsample_block_pallas.1} parent=11 // pred_check
        %p135 = pneg %p89
      $region18: #{upsample_block_pallas.1} parent=11 // pred_check_branch
        %137 = sbr.rel (%p135) target = $region20
      $region19: #{upsample_block_pallas.1} parent=11 // pred_region
        _
      $region20: #{upsample_block_pallas.1} parent=11 // pred_fallthru
        _
    $region12: #{upsample_block_pallas.1} parent=5 // pred_fallthru
      _
    %p138 = scmp.lt.s32.totalorder %s9, 2
    // Predicated region
    $region21: #{upsample_block_pallas.1} parent=5 // pred_check
      %p139 = pneg %p138
    $region22: #{upsample_block_pallas.1} parent=5 // pred_check_branch
      %141 = sbr.rel (%p139) target = $region24
    $region23: #{upsample_block_pallas.1} parent=5 // pred_region
      // Predicated region
      $region25: #{upsample_block_pallas.1} parent=23 // pred_check
        %p142 = pneg %p41
      $region26: #{upsample_block_pallas.1} parent=23 // pred_check_branch
        %144 = sbr.rel (%p142) target = $region28
      $region27: #{upsample_block_pallas.1} parent=23 // pred_region
        %p145 = scmp.lt.s32.totalorder %s16, 1
        %s146 = scalar_select %p145, %s16, 1
        %s147 = smul.addr %s146, 3
        %s148 = smul.addr %s147, 2
        %s149 = scalar_lea.vmem %s0, %s148
      $region28: #{upsample_block_pallas.1} parent=23 // pred_fallthru
        _
    $region24: #{upsample_block_pallas.1} parent=5 // pred_fallthru
      _
    %p150 = scmp.le.s32.totalorder 1, %s9
    %p151 = scmp.lt.s32.totalorder %s9, 3
    %p152 = pnand %p150, %p151
    %p153 = pneg %p152
    // Predicated region
    $region29: #{upsample_block_pallas.1} parent=5 // pred_check
      _
    $region30: #{upsample_block_pallas.1} parent=5 // pred_check_branch
      %155 = sbr.rel (%p152) target = $region32
    $region31: #{upsample_block_pallas.1} parent=5 // pred_region
      %s156 = ssub.s32 %s9, 1
      %p157 = scmp.lt.s32.totalorder %s18, 1
      %s158 = scalar_select %p157, %s18, 1
      %s159 = smul.addr %s158, 3
      %s160 = smul.addr %s159, 2
      %s161 = scalar_lea.vmem %s0, %s160
      %p162 = pneg %p47
      %p163 = pneg %p44
      %p164 = pneg %p68
      %p165 = pneg %p65
      %p166 = pneg %p89
      %p167 = pneg %p86
      %p168 = pneg %p117
      %p169 = pneg %p114
      %s170 = smul.u32 3, %s19
      %p171 = scmp.lt.s32.totalorder %s18, 1
      %s172 = scalar_select %p171, %s18, 1
      %p173 = scmp.lt.s32.totalorder %s170, 2
      %s174 = scalar_select %p173, %s170, 2
      %s175 = smul.addr %s172, 6
      %s176 = sadd.s32 %s174, %s175
      %s177 = smul.addr %s176, 8
      %s178 = scalar_lea.vmem %s3, %s177
      %p179 = scmp.lt.s32.totalorder %s18, 1
      %s180 = scalar_select %p179, %s18, 1
      %s181 = smul.addr %s180, 3
      %s182 = smul.addr %s181, 2
      %s183 = scalar_lea.vmem %s0, %s182
      %s184 = smul.u32 3, %s19
      %p185 = scmp.lt.s32.totalorder %s18, 1
      %s186 = scalar_select %p185, %s18, 1
      %p187 = scmp.lt.s32.totalorder %s184, 2
      %s188 = scalar_select %p187, %s184, 2
      %s189 = smul.addr %s186, 6
      %s190 = sadd.s32 %s188, %s189
      %s191 = smul.addr %s190, 8
      %s192 = scalar_lea.vmem %s3, %s191
      %s193 = smul.u32 3, %s19
      %v195 = vld [vmem:[%s2] sm:$0xff]
      %v196 = vld [vmem:[%s2 + $0x8] sm:$0xff]
      %v197 = vld [vmem:[%s183] sm:$0x3f]
      %v198 = vld [vmem:[%s1] sm:$0xf]
      %v199 = vld [vmem:[%s1 + $0x4] sm:$0xf]
      %s200 = scalar_lea.vmem %s1, 8
      %v201 = vld [vmem:[%s200] sm:$0xf]
      %v202 = vld [vmem:[%s200 + $0x4] sm:$0xf]
      %v205 = vunpack.c.l.b16 %v201
      %v206 = vunpack.c.l.b16 %v202
      %v207 = vpack.c.b16 %v206, %v205
      %v209 = vcombine.high %v197, %v197
      %v211 = vunpack.c.l.s4 1983009808
      %v212 = vunpack.c.0.s8 %v211
      %v213 = vlaneseq
      %v214 = vshrl.u32 %v213, 7
      %v215 = vsub.s32 %v212, %v214
      %v216 = vrot.slane %v197, %v215
      %v218 = vunpack.c.l.s4 1983009808
      %v219 = vunpack.c.0.s8 %v218
      %v220 = vlaneseq
      %v221 = vshrl.u32 %v220, 7
      %v222 = vsub.s32 %v219, %v221
      %v223 = vrot.slane %v209, %v222
      %v224 = vcombine.high %v216, %v216
      %225 = vrot.lane.b32.xlu0 %v216, 127
      %v226 = vpop.permute.xlu0 %225
      %227 = vrot.lane.b32.xlu0 %v224, 127
      %v228 = vpop.permute.xlu0 %227
      %229 = vrot.lane.b32.xlu0 %v223, 127
      %v230 = vpop.permute.xlu0 %229
      %vm231 = vcmask 1039360
      %v232 = vsel %vm231, %v226, %v228
      %v233 = vsel %vm231, %v228, %v230
      %vm234 = vcmask 31744
      %v236 = vsel %vm234, %v207, 0
      %vm238 = vcmask 1041408
      %v240 = vsel %vm238, %v232, 0
      %v243 = vsel %vm238, %v233, 0
      %v246 = vsel %vm238, %v230, 0
      %248 = vmatprep.subr.bf16.mxu0 %v243
      %249 = vmatpush1.bf16.msra.mxu0 %v240
      %250 = vmatprep.subr.bf16.mxu0 0
      %251 = vmatpush1.bf16.msra.mxu0 0
      %252 = vmatprep.subr.bf16.mxu0 0
      %253 = vmatpush1.bf16.msra.mxu0 0
      %254 = vmatprep.subr.bf16.mxu0 0
      %255 = vmatpush1.bf16.msra.mxu0 0
      %256 = vmatprep.subr.bf16.mxu0 0
      %257 = vmatpush1.bf16.msra.mxu0 0
      %258 = vmatprep.subr.bf16.mxu0 0
      %259 = vmatpush1.bf16.msra.mxu0 0
      %260 = vmatprep.subr.bf16.mxu0 0
      %261 = vmatpush1.bf16.msra.mxu0 0
      %262 = vmatprep.subr.bf16.mxu0 0
      %263 = vmatpush1.bf16.msra.mxu0 0
      %264 = vmatprep.subr.bf16.mxu0 0
      %265 = vmatpush1.bf16.msra.mxu0 0
      %266 = vmatprep.subr.bf16.mxu0 0
      %267 = vmatpush1.bf16.msra.mxu0 0
      %268 = vmatprep.subr.bf16.mxu0 0
      %269 = vmatpush1.bf16.msra.mxu0 0
      %270 = vmatprep.subr.bf16.mxu0 0
      %271 = vmatpush1.bf16.msra.mxu0 0
      %272 = vmatprep.subr.bf16.mxu0 0
      %273 = vmatpush1.bf16.msra.mxu0 0
      %274 = vmatprep.subr.bf16.mxu0 0
      %275 = vmatpush1.bf16.msra.mxu0 0
      %276 = vmatprep.subr.bf16.mxu0 0
      %277 = vmatpush1.bf16.msra.mxu0 0
      %278 = vmatprep.subr.bf16.mxu0 0
      %279 = vmatpush1.bf16.msra.mxu0 0
      %280 = vmatprep.mubr.bf16.mxu0 0
      %281 = vmatmul.mubr.bf16.gmra.mrb[0].mxu0 %v236
      %v282 = vpop.f32.mrb[0].mxu0
      %v283 = vadd.f32 0.0, %v282
      %v284 = vpop.f32.mrb[0].mxu0
      %v285 = vadd.f32 0.0, %v284
      %v286 = vpop.f32.mrb[0].mxu0
      %v287 = vadd.f32 0.0, %v286
      %v288 = vpop.f32.mrb[0].mxu0
      %v289 = vadd.f32 0.0, %v288
      %290 = vdwg.mxu0
      %291 = vmatprep.subr.bf16.mxu0 0
      %292 = vmatpush1.bf16.msra.mxu0 %v246
      %293 = vmatprep.subr.bf16.mxu0 0
      %294 = vmatpush1.bf16.msra.mxu0 0
      %295 = vmatprep.subr.bf16.mxu0 0
      %296 = vmatpush1.bf16.msra.mxu0 0
      %297 = vmatprep.subr.bf16.mxu0 0
      %298 = vmatpush1.bf16.msra.mxu0 0
      %299 = vmatprep.subr.bf16.mxu0 0
      %300 = vmatpush1.bf16.msra.mxu0 0
      %301 = vmatprep.subr.bf16.mxu0 0
      %302 = vmatpush1.bf16.msra.mxu0 0
      %303 = vmatprep.subr.bf16.mxu0 0
      %304 = vmatpush1.bf16.msra.mxu0 0
      %305 = vmatprep.subr.bf16.mxu0 0
      %306 = vmatpush1.bf16.msra.mxu0 0
      %307 = vmatprep.subr.bf16.mxu0 0
      %308 = vmatpush1.bf16.msra.mxu0 0
      %309 = vmatprep.subr.bf16.mxu0 0
      %310 = vmatpush1.bf16.msra.mxu0 0
      %311 = vmatprep.subr.bf16.mxu0 0
      %312 = vmatpush1.bf16.msra.mxu0 0
      %313 = vmatprep.subr.bf16.mxu0 0
      %314 = vmatpush1.bf16.msra.mxu0 0
      %315 = vmatprep.subr.bf16.mxu0 0
      %316 = vmatpush1.bf16.msra.mxu0 0
      %317 = vmatprep.subr.bf16.mxu0 0
      %318 = vmatpush1.bf16.msra.mxu0 0
      %319 = vmatprep.subr.bf16.mxu0 0
      %320 = vmatpush1.bf16.msra.mxu0 0
      %321 = vmatprep.subr.bf16.mxu0 0
      %322 = vmatpush1.bf16.msra.mxu0 0
      %323 = vmatprep.mubr.bf16.mxu0 0
      %324 = vmatmul.mubr.bf16.gmra.mrb[0].mxu0 %v236
      %v325 = vpop.f32.mrb[0].mxu0
      %v326 = vadd.f32 0.0, %v325
      %v327 = vpop.f32.mrb[0].mxu0
      %v328 = vpop.f32.mrb[0].mxu0
      %v329 = vadd.f32 0.0, %v328
      %v330 = vpop.f32.mrb[0].mxu0
      %331 = vdwg.mxu0
      %v334 = vunpack.c.l.b16 %v198
      %v335 = vunpack.c.l.b16 %v199
      %v336 = vpack.c.b16 %v335, %v334
      %v338 = vsel %vm234, %v336, 0
      %v341 = vsel %vm238, %v216, 0
      %v344 = vsel %vm238, %v224, 0
      %v347 = vsel %vm238, %v223, 0
      %349 = vmatprep.subr.bf16.mxu0 %v344
      %350 = vmatpush1.bf16.msra.mxu0 %v341
      %351 = vmatprep.subr.bf16.mxu0 0
      %352 = vmatpush1.bf16.msra.mxu0 0
      %353 = vmatprep.subr.bf16.mxu0 0
      %354 = vmatpush1.bf16.msra.mxu0 0
      %355 = vmatprep.subr.bf16.mxu0 0
      %356 = vmatpush1.bf16.msra.mxu0 0
      %357 = vmatprep.subr.bf16.mxu0 0
      %358 = vmatpush1.bf16.msra.mxu0 0
      %359 = vmatprep.subr.bf16.mxu0 0
      %360 = vmatpush1.bf16.msra.mxu0 0
      %361 = vmatprep.subr.bf16.mxu0 0
      %362 = vmatpush1.bf16.msra.mxu0 0
      %363 = vmatprep.subr.bf16.mxu0 0
      %364 = vmatpush1.bf16.msra.mxu0 0
      %365 = vmatprep.subr.bf16.mxu0 0
      %366 = vmatpush1.bf16.msra.mxu0 0
      %367 = vmatprep.subr.bf16.mxu0 0
      %368 = vmatpush1.bf16.msra.mxu0 0
      %369 = vmatprep.subr.bf16.mxu0 0
      %370 = vmatpush1.bf16.msra.mxu0 0
      %371 = vmatprep.subr.bf16.mxu0 0
      %372 = vmatpush1.bf16.msra.mxu0 0
      %373 = vmatprep.subr.bf16.mxu0 0
      %374 = vmatpush1.bf16.msra.mxu0 0
      %375 = vmatprep.subr.bf16.mxu0 0
      %376 = vmatpush1.bf16.msra.mxu0 0
      %377 = vmatprep.subr.bf16.mxu0 0
      %378 = vmatpush1.bf16.msra.mxu0 0
      %379 = vmatprep.subr.bf16.mxu0 0
      %380 = vmatpush1.bf16.msra.mxu0 0
      %381 = vmatprep.mubr.bf16.mxu0 0
      %382 = vmatmul.mubr.bf16.gmra.mrb[0].mxu0 %v338
      %v383 = vpop.f32.mrb[0].mxu0
      %v384 = vadd.f32 %v283, %v383
      %v385 = vpop.f32.mrb[0].mxu0
      %v386 = vadd.f32 %v285, %v385
      %v387 = vpop.f32.mrb[0].mxu0
      %v388 = vadd.f32 %v287, %v387
      %v389 = vpop.f32.mrb[0].mxu0
      %v390 = vadd.f32 %v289, %v389
      %391 = vdwg.mxu0
      %392 = vmatprep.subr.bf16.mxu0 0
      %393 = vmatpush1.bf16.msra.mxu0 %v347
      %394 = vmatprep.subr.bf16.mxu0 0
      %395 = vmatpush1.bf16.msra.mxu0 0
      %396 = vmatprep.subr.bf16.mxu0 0
      %397 = vmatpush1.bf16.msra.mxu0 0
      %398 = vmatprep.subr.bf16.mxu0 0
      %399 = vmatpush1.bf16.msra.mxu0 0
      %400 = vmatprep.subr.bf16.mxu0 0
      %401 = vmatpush1.bf16.msra.mxu0 0
      %402 = vmatprep.subr.bf16.mxu0 0
      %403 = vmatpush1.bf16.msra.mxu0 0
      %404 = vmatprep.subr.bf16.mxu0 0
      %405 = vmatpush1.bf16.msra.mxu0 0
      %406 = vmatprep.subr.bf16.mxu0 0
      %407 = vmatpush1.bf16.msra.mxu0 0
      %408 = vmatprep.subr.bf16.mxu0 0
      %409 = vmatpush1.bf16.msra.mxu0 0
      %410 = vmatprep.subr.bf16.mxu0 0
      %411 = vmatpush1.bf16.msra.mxu0 0
      %412 = vmatprep.subr.bf16.mxu0 0
      %413 = vmatpush1.bf16.msra.mxu0 0
      %414 = vmatprep.subr.bf16.mxu0 0
      %415 = vmatpush1.bf16.msra.mxu0 0
      %416 = vmatprep.subr.bf16.mxu0 0
      %417 = vmatpush1.bf16.msra.mxu0 0
      %418 = vmatprep.subr.bf16.mxu0 0
      %419 = vmatpush1.bf16.msra.mxu0 0
      %420 = vmatprep.subr.bf16.mxu0 0
      %421 = vmatpush1.bf16.msra.mxu0 0
      %422 = vmatprep.subr.bf16.mxu0 0
      %423 = vmatpush1.bf16.msra.mxu0 0
      %424 = vmatprep.mubr.bf16.mxu0 0
      %425 = vmatmul.mubr.bf16.gmra.mrb[0].mxu0 %v338
      %v426 = vpop.f32.mrb[0].mxu0
      %v427 = vadd.f32 %v326, %v426
      %v428 = vpop.f32.mrb[0].mxu0
      %v429 = vpop.f32.mrb[0].mxu0
      %v430 = vadd.f32 %v329, %v429
      %v431 = vpop.f32.mrb[0].mxu0
      %432 = vdwg.mxu0
      %v433 = vld [vmem:[%s183] sm:$0x3f]
      %s434 = scalar_lea.vmem %s1, 16
      %v435 = vld [vmem:[%s434] sm:$0xf]
      %v436 = vld [vmem:[%s434 + $0x4] sm:$0xf]
      %v439 = vunpack.c.l.b16 %v435
      %v440 = vunpack.c.l.b16 %v436
      %v441 = vpack.c.b16 %v440, %v439
      %v443 = vcombine.high %v433, %v433
      %v445 = vunpack.c.l.s4 1983009808
      %v446 = vunpack.c.0.s8 %v445
      %v447 = vlaneseq
      %v448 = vshrl.u32 %v447, 7
      %v449 = vsub.s32 %v446, %v448
      %v450 = vrot.slane %v433, %v449
      %v452 = vunpack.c.l.s4 1983009808
      %v453 = vunpack.c.0.s8 %v452
      %v454 = vlaneseq
      %v455 = vshrl.u32 %v454, 7
      %v456 = vsub.s32 %v453, %v455
      %v457 = vrot.slane %v443, %v456
      %v458 = vcombine.high %v450, %v450
      %459 = vrot.lane.b32.xlu0 %v450, 126
      %v460 = vpop.permute.xlu0 %459
      %461 = vrot.lane.b32.xlu0 %v458, 126
      %v462 = vpop.permute.xlu0 %461
      %463 = vrot.lane.b32.xlu0 %v457, 126
      %v464 = vpop.permute.xlu0 %463
      %vm465 = vcmask 1031168
      %v466 = vsel %vm465, %v460, %v462
      %v467 = vsel %vm465, %v462, %v464
      %v469 = vsel %vm234, %v441, 0
      %v472 = vsel %vm238, %v466, 0
      %v475 = vsel %vm238, %v467, 0
      %v478 = vsel %vm238, %v464, 0
      %480 = vmatprep.subr.bf16.mxu0 %v475
      %481 = vmatpush1.bf16.msra.mxu0 %v472
      %482 = vmatprep.subr.bf16.mxu0 0
      %483 = vmatpush1.bf16.msra.mxu0 0
      %484 = vmatprep.subr.bf16.mxu0 0
      %485 = vmatpush1.bf16.msra.mxu0 0
      %486 = vmatprep.subr.bf16.mxu0 0
      %487 = vmatpush1.bf16.msra.mxu0 0
      %488 = vmatprep.subr.bf16.mxu0 0
      %489 = vmatpush1.bf16.msra.mxu0 0
      %490 = vmatprep.subr.bf16.mxu0 0
      %491 = vmatpush1.bf16.msra.mxu0 0
      %492 = vmatprep.subr.bf16.mxu0 0
      %493 = vmatpush1.bf16.msra.mxu0 0
      %494 = vmatprep.subr.bf16.mxu0 0
      %495 = vmatpush1.bf16.msra.mxu0 0
      %496 = vmatprep.subr.bf16.mxu0 0
      %497 = vmatpush1.bf16.msra.mxu0 0
      %498 = vmatprep.subr.bf16.mxu0 0
      %499 = vmatpush1.bf16.msra.mxu0 0
      %500 = vmatprep.subr.bf16.mxu0 0
      %501 = vmatpush1.bf16.msra.mxu0 0
      %502 = vmatprep.subr.bf16.mxu0 0
      %503 = vmatpush1.bf16.msra.mxu0 0
      %504 = vmatprep.subr.bf16.mxu0 0
      %505 = vmatpush1.bf16.msra.mxu0 0
      %506 = vmatprep.subr.bf16.mxu0 0
      %507 = vmatpush1.bf16.msra.mxu0 0
      %508 = vmatprep.subr.bf16.mxu0 0
      %509 = vmatpush1.bf16.msra.mxu0 0
      %510 = vmatprep.subr.bf16.mxu0 0
      %511 = vmatpush1.bf16.msra.mxu0 0
      %512 = vmatprep.mubr.bf16.mxu0 0
      %513 = vmatmul.mubr.bf16.gmra.mrb[0].mxu0 %v469
      %v514 = vpop.f32.mrb[0].mxu0
      %v515 = vadd.f32 0.0, %v514
      %v516 = vpop.f32.mrb[0].mxu0
      %v517 = vadd.f32 0.0, %v516
      %v518 = vpop.f32.mrb[0].mxu0
      %v519 = vadd.f32 0.0, %v518
      %v520 = vpop.f32.mrb[0].mxu0
      %v521 = vadd.f32 0.0, %v520
      %522 = vdwg.mxu0
      %523 = vmatprep.subr.bf16.mxu0 0
      %524 = vmatpush1.bf16.msra.mxu0 %v478
      %525 = vmatprep.subr.bf16.mxu0 0
      %526 = vmatpush1.bf16.msra.mxu0 0
      %527 = vmatprep.subr.bf16.mxu0 0
      %528 = vmatpush1.bf16.msra.mxu0 0
      %529 = vmatprep.subr.bf16.mxu0 0
      %530 = vmatpush1.bf16.msra.mxu0 0
      %531 = vmatprep.subr.bf16.mxu0 0
      %532 = vmatpush1.bf16.msra.mxu0 0
      %533 = vmatprep.subr.bf16.mxu0 0
      %534 = vmatpush1.bf16.msra.mxu0 0
      %535 = vmatprep.subr.bf16.mxu0 0
      %536 = vmatpush1.bf16.msra.mxu0 0
      %537 = vmatprep.subr.bf16.mxu0 0
      %538 = vmatpush1.bf16.msra.mxu0 0
      %539 = vmatprep.subr.bf16.mxu0 0
      %540 = vmatpush1.bf16.msra.mxu0 0
      %541 = vmatprep.subr.bf16.mxu0 0
      %542 = vmatpush1.bf16.msra.mxu0 0
      %543 = vmatprep.subr.bf16.mxu0 0
      %544 = vmatpush1.bf16.msra.mxu0 0
      %545 = vmatprep.subr.bf16.mxu0 0
      %546 = vmatpush1.bf16.msra.mxu0 0
      %547 = vmatprep.subr.bf16.mxu0 0
      %548 = vmatpush1.bf16.msra.mxu0 0
      %549 = vmatprep.subr.bf16.mxu0 0
      %550 = vmatpush1.bf16.msra.mxu0 0
      %551 = vmatprep.subr.bf16.mxu0 0
      %552 = vmatpush1.bf16.msra.mxu0 0
      %553 = vmatprep.subr.bf16.mxu0 0
      %554 = vmatpush1.bf16.msra.mxu0 0
      %555 = vmatprep.mubr.bf16.mxu0 0
      %556 = vmatmul.mubr.bf16.gmra.mrb[0].mxu0 %v469
      %v557 = vpop.f32.mrb[0].mxu0
      %v558 = vadd.f32 0.0, %v557
      %v559 = vpop.f32.mrb[0].mxu0
      %v560 = vpop.f32.mrb[0].mxu0
      %v561 = vadd.f32 0.0, %v560
      %v562 = vpop.f32.mrb[0].mxu0
      %563 = vdwg.mxu0
      %v564 = vadd.f32 %v384, %v515
      %v565 = vadd.f32 %v386, %v517
      %v566 = vadd.f32 %v427, %v558
      %v567 = vadd.f32 %v388, %v519
      %v568 = vadd.f32 %v390, %v521
      %v569 = vadd.f32 %v430, %v561
      %v570 = vld [vmem:[%s183] sm:$0x3f]
      %s571 = scalar_lea.vmem %s1, 24
      %v572 = vld [vmem:[%s571] sm:$0xf]
      %v573 = vld [vmem:[%s571 + $0x4] sm:$0xf]
      %v576 = vunpack.c.l.b16 %v572
      %v577 = vunpack.c.l.b16 %v573
      %v578 = vpack.c.b16 %v577, %v576
      %v580 = vcombine.high %v570, %v570
      %v582 = vunpack.c.l.s4 1983009808
      %v583 = vunpack.c.0.s8 %v582
      %v584 = vlaneseq
      %v585 = vshrl.u32 %v584, 7
      %v586 = vsub.s32 %v583, %v585
      %v587 = vrot.slane %v570, %v586
      %v589 = vunpack.c.l.s4 1983009808
      %v590 = vunpack.c.0.s8 %v589
      %v591 = vlaneseq
      %v592 = vshrl.u32 %v591, 7
      %v593 = vsub.s32 %v590, %v592
      %v594 = vrot.slane %v580, %v593
      %v595 = vcombine.high %v587, %v587
      %596 = vrot.lane.b32.xlu0 %v587, 110
      %v597 = vpop.permute.xlu0 %596
      %598 = vrot.lane.b32.xlu0 %v595, 110
      %v599 = vpop.permute.xlu0 %598
      %600 = vrot.lane.b32.xlu0 %v594, 110
      %v601 = vpop.permute.xlu0 %600
      %vm602 = vcmask 900096
      %v603 = vsel %vm602, %v597, %v599
      %v604 = vsel %vm602, %v599, %v601
      %v606 = vsel %vm234, %v578, 0
      %v609 = vsel %vm238, %v603, 0
      %v612 = vsel %vm238, %v604, 0
      %v615 = vsel %vm238, %v601, 0
      %617 = vmatprep.subr.bf16.mxu0 %v612
      %618 = vmatpush1.bf16.msra.mxu0 %v609
      %619 = vmatprep.subr.bf16.mxu0 0
      %620 = vmatpush1.bf16.msra.mxu0 0
      %621 = vmatprep.subr.bf16.mxu0 0
      %622 = vmatpush1.bf16.msra.mxu0 0
      %623 = vmatprep.subr.bf16.mxu0 0
      %624 = vmatpush1.bf16.msra.mxu0 0
      %625 = vmatprep.subr.bf16.mxu0 0
      %626 = vmatpush1.bf16.msra.mxu0 0
      %627 = vmatprep.subr.bf16.mxu0 0
      %628 = vmatpush1.bf16.msra.mxu0 0
      %629 = vmatprep.subr.bf16.mxu0 0
      %630 = vmatpush1.bf16.msra.mxu0 0
      %631 = vmatprep.subr.bf16.mxu0 0
      %632 = vmatpush1.bf16.msra.mxu0 0
      %633 = vmatprep.subr.bf16.mxu0 0
      %634 = vmatpush1.bf16.msra.mxu0 0
      %635 = vmatprep.subr.bf16.mxu0 0
      %636 = vmatpush1.bf16.msra.mxu0 0
      %637 = vmatprep.subr.bf16.mxu0 0
      %638 = vmatpush1.bf16.msra.mxu0 0
      %639 = vmatprep.subr.bf16.mxu0 0
      %640 = vmatpush1.bf16.msra.mxu0 0
      %641 = vmatprep.subr.bf16.mxu0 0
      %642 = vmatpush1.bf16.msra.mxu0 0
      %643 = vmatprep.subr.bf16.mxu0 0
      %644 = vmatpush1.bf16.msra.mxu0 0
      %645 = vmatprep.subr.bf16.mxu0 0
      %646 = vmatpush1.bf16.msra.mxu0 0
      %647 = vmatprep.subr.bf16.mxu0 0
      %648 = vmatpush1.bf16.msra.mxu0 0
      %649 = vmatprep.mubr.bf16.mxu0 0
      %650 = vmatmul.mubr.bf16.gmra.mrb[0].mxu0 %v606
      %v651 = vpop.f32.mrb[0].mxu0
      %v652 = vadd.f32 0.0, %v651
      %v653 = vpop.f32.mrb[0].mxu0
      %v654 = vadd.f32 0.0, %v653
      %v655 = vpop.f32.mrb[0].mxu0
      %v656 = vadd.f32 0.0, %v655
      %v657 = vpop.f32.mrb[0].mxu0
      %v658 = vadd.f32 0.0, %v657
      %659 = vdwg.mxu0
      %660 = vmatprep.subr.bf16.mxu0 0
      %661 = vmatpush1.bf16.msra.mxu0 %v615
      %662 = vmatprep.subr.bf16.mxu0 0
      %663 = vmatpush1.bf16.msra.mxu0 0
      %664 = vmatprep.subr.bf16.mxu0 0
      %665 = vmatpush1.bf16.msra.mxu0 0
      %666 = vmatprep.subr.bf16.mxu0 0
      %667 = vmatpush1.bf16.msra.mxu0 0
      %668 = vmatprep.subr.bf16.mxu0 0
      %669 = vmatpush1.bf16.msra.mxu0 0
      %670 = vmatprep.subr.bf16.mxu0 0
      %671 = vmatpush1.bf16.msra.mxu0 0
      %672 = vmatprep.subr.bf16.mxu0 0
      %673 = vmatpush1.bf16.msra.mxu0 0
      %674 = vmatprep.subr.bf16.mxu0 0
      %675 = vmatpush1.bf16.msra.mxu0 0
      %676 = vmatprep.subr.bf16.mxu0 0
      %677 = vmatpush1.bf16.msra.mxu0 0
      %678 = vmatprep.subr.bf16.mxu0 0
      %679 = vmatpush1.bf16.msra.mxu0 0
      %680 = vmatprep.subr.bf16.mxu0 0
      %681 = vmatpush1.bf16.msra.mxu0 0
      %682 = vmatprep.subr.bf16.mxu0 0
      %683 = vmatpush1.bf16.msra.mxu0 0
      %684 = vmatprep.subr.bf16.mxu0 0
      %685 = vmatpush1.bf16.msra.mxu0 0
      %686 = vmatprep.subr.bf16.mxu0 0
      %687 = vmatpush1.bf16.msra.mxu0 0
      %688 = vmatprep.subr.bf16.mxu0 0
      %689 = vmatpush1.bf16.msra.mxu0 0
      %690 = vmatprep.subr.bf16.mxu0 0
      %691 = vmatpush1.bf16.msra.mxu0 0
      %692 = vmatprep.mubr.bf16.mxu0 0
      %693 = vmatmul.mubr.bf16.gmra.mrb[0].mxu0 %v606
      %v694 = vpop.f32.mrb[0].mxu0
      %v695 = vadd.f32 0.0, %v694
      %v696 = vpop.f32.mrb[0].mxu0
      %v697 = vpop.f32.mrb[0].mxu0
      %v698 = vadd.f32 0.0, %v697
      %v699 = vpop.f32.mrb[0].mxu0
      %700 = vdwg.mxu0
      %v701 = vadd.f32 %v564, %v652
      %v702 = vadd.f32 %v565, %v654
      %v703 = vadd.f32 %v566, %v695
      %v704 = vadd.f32 %v567, %v656
      %v705 = vadd.f32 %v568, %v658
      %v706 = vadd.f32 %v569, %v698
      %v707 = vld [vmem:[%s183] sm:$0x3f]
      %s708 = scalar_lea.vmem %s1, 32
      %v709 = vld [vmem:[%s708] sm:$0xf]
      %v710 = vld [vmem:[%s708 + $0x4] sm:$0xf]
      %v713 = vunpack.c.l.b16 %v709
      %v714 = vunpack.c.l.b16 %v710
      %v715 = vpack.c.b16 %v714, %v713
      %v717 = vcombine.high %v707, %v707
      %v719 = vunpack.c.l.s4 1983009808
      %v720 = vunpack.c.0.s8 %v719
      %v721 = vlaneseq
      %v722 = vshrl.u32 %v721, 7
      %v723 = vsub.s32 %v720, %v722
      %v724 = vrot.slane %v707, %v723
      %v726 = vunpack.c.l.s4 1983009808
      %v727 = vunpack.c.0.s8 %v726
      %v728 = vlaneseq
      %v729 = vshrl.u32 %v728, 7
      %v730 = vsub.s32 %v727, %v729
      %v731 = vrot.slane %v717, %v730
      %v732 = vcombine.high %v724, %v724
      %733 = vrot.lane.b32.xlu0 %v724, 109
      %v734 = vpop.permute.xlu0 %733
      %735 = vrot.lane.b32.xlu0 %v732, 109
      %v736 = vpop.permute.xlu0 %735
      %737 = vrot.lane.b32.xlu0 %v731, 109
      %v738 = vpop.permute.xlu0 %737
      %vm739 = vcmask 891904
      %v740 = vsel %vm739, %v734, %v736
      %v741 = vsel %vm739, %v736, %v738
      %v743 = vsel %vm234, %v715, 0
      %v746 = vsel %vm238, %v740, 0
      %v749 = vsel %vm238, %v741, 0
      %v752 = vsel %vm238, %v738, 0
      %754 = vmatprep.subr.bf16.mxu0 %v749
      %755 = vmatpush1.bf16.msra.mxu0 %v746
      %756 = vmatprep.subr.bf16.mxu0 0
      %757 = vmatpush1.bf16.msra.mxu0 0
      %758 = vmatprep.subr.bf16.mxu0 0
      %759 = vmatpush1.bf16.msra.mxu0 0
      %760 = vmatprep.subr.bf16.mxu0 0
      %761 = vmatpush1.bf16.msra.mxu0 0
      %762 = vmatprep.subr.bf16.mxu0 0
      %763 = vmatpush1.bf16.msra.mxu0 0
      %764 = vmatprep.subr.bf16.mxu0 0
      %765 = vmatpush1.bf16.msra.mxu0 0
      %766 = vmatprep.subr.bf16.mxu0 0
      %767 = vmatpush1.bf16.msra.mxu0 0
      %768 = vmatprep.subr.bf16.mxu0 0
      %769 = vmatpush1.bf16.msra.mxu0 0
      %770 = vmatprep.subr.bf16.mxu0 0
      %771 = vmatpush1.bf16.msra.mxu0 0
      %772 = vmatprep.subr.bf16.mxu0 0
      %773 = vmatpush1.bf16.msra.mxu0 0
      %774 = vmatprep.subr.bf16.mxu0 0
      %775 = vmatpush1.bf16.msra.mxu0 0
      %776 = vmatprep.subr.bf16.mxu0 0
      %777 = vmatpush1.bf16.msra.mxu0 0
      %778 = vmatprep.subr.bf16.mxu0 0
      %779 = vmatpush1.bf16.msra.mxu0 0
      %780 = vmatprep.subr.bf16.mxu0 0
      %781 = vmatpush1.bf16.msra.mxu0 0
      %782 = vmatprep.subr.bf16.mxu0 0
      %783 = vmatpush1.bf16.msra.mxu0 0
      %784 = vmatprep.subr.bf16.mxu0 0
      %785 = vmatpush1.bf16.msra.mxu0 0
      %786 = vmatprep.mubr.bf16.mxu0 0
      %787 = vmatmul.mubr.bf16.gmra.mrb[0].mxu0 %v743
      %v788 = vpop.f32.mrb[0].mxu0
      %v789 = vadd.f32 0.0, %v788
      %v790 = vpop.f32.mrb[0].mxu0
      %v791 = vadd.f32 0.0, %v790
      %v792 = vpop.f32.mrb[0].mxu0
      %v793 = vadd.f32 0.0, %v792
      %v794 = vpop.f32.mrb[0].mxu0
      %v795 = vadd.f32 0.0, %v794
      %796 = vdwg.mxu0
      %797 = vmatprep.subr.bf16.mxu0 0
      %798 = vmatpush1.bf16.msra.mxu0 %v752
      %799 = vmatprep.subr.bf16.mxu0 0
      %800 = vmatpush1.bf16.msra.mxu0 0
      %801 = vmatprep.subr.bf16.mxu0 0
      %802 = vmatpush1.bf16.msra.mxu0 0
      %803 = vmatprep.subr.bf16.mxu0 0
      %804 = vmatpush1.bf16.msra.mxu0 0
      %805 = vmatprep.subr.bf16.mxu0 0
      %806 = vmatpush1.bf16.msra.mxu0 0
      %807 = vmatprep.subr.bf16.mxu0 0
      %808 = vmatpush1.bf16.msra.mxu0 0
      %809 = vmatprep.subr.bf16.mxu0 0
      %810 = vmatpush1.bf16.msra.mxu0 0
      %811 = vmatprep.subr.bf16.mxu0 0
      %812 = vmatpush1.bf16.msra.mxu0 0
      %813 = vmatprep.subr.bf16.mxu0 0
      %814 = vmatpush1.bf16.msra.mxu0 0
      %815 = vmatprep.subr.bf16.mxu0 0
      %816 = vmatpush1.bf16.msra.mxu0 0
      %817 = vmatprep.subr.bf16.mxu0 0
      %818 = vmatpush1.bf16.msra.mxu0 0
      %819 = vmatprep.subr.bf16.mxu0 0
      %820 = vmatpush1.bf16.msra.mxu0 0
      %821 = vmatprep.subr.bf16.mxu0 0
      %822 = vmatpush1.bf16.msra.mxu0 0
      %823 = vmatprep.subr.bf16.mxu0 0
      %824 = vmatpush1.bf16.msra.mxu0 0
      %825 = vmatprep.subr.bf16.mxu0 0
      %826 = vmatpush1.bf16.msra.mxu0 0
      %827 = vmatprep.subr.bf16.mxu0 0
      %828 = vmatpush1.bf16.msra.mxu0 0
      %829 = vmatprep.mubr.bf16.mxu0 0
      %830 = vmatmul.mubr.bf16.gmra.mrb[0].mxu0 %v743
      %v831 = vpop.f32.mrb[0].mxu0
      %v832 = vadd.f32 0.0, %v831
      %v833 = vpop.f32.mrb[0].mxu0
      %v834 = vpop.f32.mrb[0].mxu0
      %v835 = vadd.f32 0.0, %v834
      %v836 = vpop.f32.mrb[0].mxu0
      %837 = vdwg.mxu0
      %v838 = vadd.f32 %v701, %v789
      %v839 = vadd.f32 %v702, %v791
      %v840 = vadd.f32 %v703, %v832
      %v841 = vadd.f32 %v704, %v793
      %v842 = vadd.f32 %v705, %v795
      %v843 = vadd.f32 %v706, %v835
      %v844 = vld [vmem:[%s183] sm:$0x3f]
      %s845 = scalar_lea.vmem %s1, 40
      %v846 = vld [vmem:[%s845] sm:$0xf]
      %v847 = vld [vmem:[%s845 + $0x4] sm:$0xf]
      %v850 = vunpack.c.l.b16 %v846
      %v851 = vunpack.c.l.b16 %v847
      %v852 = vpack.c.b16 %v851, %v850
      %v854 = vcombine.high %v844, %v844
      %v856 = vunpack.c.l.s4 1983009808
      %v857 = vunpack.c.0.s8 %v856
      %v858 = vlaneseq
      %v859 = vshrl.u32 %v858, 7
      %v860 = vsub.s32 %v857, %v859
      %v861 = vrot.slane %v844, %v860
      %v863 = vunpack.c.l.s4 1983009808
      %v864 = vunpack.c.0.s8 %v863
      %v865 = vlaneseq
      %v866 = vshrl.u32 %v865, 7
      %v867 = vsub.s32 %v864, %v866
      %v868 = vrot.slane %v854, %v867
      %v869 = vcombine.high %v861, %v861
      %870 = vrot.lane.b32.xlu0 %v861, 108
      %v871 = vpop.permute.xlu0 %870
      %872 = vrot.lane.b32.xlu0 %v869, 108
      %v873 = vpop.permute.xlu0 %872
      %874 = vrot.lane.b32.xlu0 %v868, 108
      %v875 = vpop.permute.xlu0 %874
      %vm876 = vcmask 883712
      %v877 = vsel %vm876, %v871, %v873
      %v878 = vsel %vm876, %v873, %v875
      %v880 = vsel %vm234, %v852, 0
      %v883 = vsel %vm238, %v877, 0
      %v886 = vsel %vm238, %v878, 0
      %v889 = vsel %vm238, %v875, 0
      %891 = vmatprep.subr.bf16.mxu0 %v886
      %892 = vmatpush1.bf16.msra.mxu0 %v883
      %893 = vmatprep.subr.bf16.mxu0 0
      %894 = vmatpush1.bf16.msra.mxu0 0
      %895 = vmatprep.subr.bf16.mxu0 0
      %896 = vmatpush1.bf16.msra.mxu0 0
      %897 = vmatprep.subr.bf16.mxu0 0
      %898 = vmatpush1.bf16.msra.mxu0 0
      %899 = vmatprep.subr.bf16.mxu0 0
      %900 = vmatpush1.bf16.msra.mxu0 0
      %901 = vmatprep.subr.bf16.mxu0 0
      %902 = vmatpush1.bf16.msra.mxu0 0
      %903 = vmatprep.subr.bf16.mxu0 0
      %904 = vmatpush1.bf16.msra.mxu0 0
      %905 = vmatprep.subr.bf16.mxu0 0
      %906 = vmatpush1.bf16.msra.mxu0 0
      %907 = vmatprep.subr.bf16.mxu0 0
      %908 = vmatpush1.bf16.msra.mxu0 0
      %909 = vmatprep.subr.bf16.mxu0 0
      %910 = vmatpush1.bf16.msra.mxu0 0
      %911 = vmatprep.subr.bf16.mxu0 0
      %912 = vmatpush1.bf16.msra.mxu0 0
      %913 = vmatprep.subr.bf16.mxu0 0
      %914 = vmatpush1.bf16.msra.mxu0 0
      %915 = vmatprep.subr.bf16.mxu0 0
      %916 = vmatpush1.bf16.msra.mxu0 0
      %917 = vmatprep.subr.bf16.mxu0 0
      %918 = vmatpush1.bf16.msra.mxu0 0
      %919 = vmatprep.subr.bf16.mxu0 0
      %920 = vmatpush1.bf16.msra.mxu0 0
      %921 = vmatprep.subr.bf16.mxu0 0
      %922 = vmatpush1.bf16.msra.mxu0 0
      %923 = vmatprep.mubr.bf16.mxu0 0
      %924 = vmatmul.mubr.bf16.gmra.mrb[0].mxu0 %v880
      %v925 = vpop.f32.mrb[0].mxu0
      %v926 = vadd.f32 0.0, %v925
      %v927 = vpop.f32.mrb[0].mxu0
      %v928 = vadd.f32 0.0, %v927
      %v929 = vpop.f32.mrb[0].mxu0
      %v930 = vadd.f32 0.0, %v929
      %v931 = vpop.f32.mrb[0].mxu0
      %v932 = vadd.f32 0.0, %v931
      %933 = vdwg.mxu0
      %934 = vmatprep.subr.bf16.mxu0 0
      %935 = vmatpush1.bf16.msra.mxu0 %v889
      %936 = vmatprep.subr.bf16.mxu0 0
      %937 = vmatpush1.bf16.msra.mxu0 0
      %938 = vmatprep.subr.bf16.mxu0 0
      %939 = vmatpush1.bf16.msra.mxu0 0
      %940 = vmatprep.subr.bf16.mxu0 0
      %941 = vmatpush1.bf16.msra.mxu0 0
      %942 = vmatprep.subr.bf16.mxu0 0
      %943 = vmatpush1.bf16.msra.mxu0 0
      %944 = vmatprep.subr.bf16.mxu0 0
      %945 = vmatpush1.bf16.msra.mxu0 0
      %946 = vmatprep.subr.bf16.mxu0 0
      %947 = vmatpush1.bf16.msra.mxu0 0
      %948 = vmatprep.subr.bf16.mxu0 0
      %949 = vmatpush1.bf16.msra.mxu0 0
      %950 = vmatprep.subr.bf16.mxu0 0
      %951 = vmatpush1.bf16.msra.mxu0 0
      %952 = vmatprep.subr.bf16.mxu0 0
      %953 = vmatpush1.bf16.msra.mxu0 0
      %954 = vmatprep.subr.bf16.mxu0 0
      %955 = vmatpush1.bf16.msra.mxu0 0
      %956 = vmatprep.subr.bf16.mxu0 0
      %957 = vmatpush1.bf16.msra.mxu0 0
      %958 = vmatprep.subr.bf16.mxu0 0
      %959 = vmatpush1.bf16.msra.mxu0 0
      %960 = vmatprep.subr.bf16.mxu0 0
      %961 = vmatpush1.bf16.msra.mxu0 0
      %962 = vmatprep.subr.bf16.mxu0 0
      %963 = vmatpush1.bf16.msra.mxu0 0
      %964 = vmatprep.subr.bf16.mxu0 0
      %965 = vmatpush1.bf16.msra.mxu0 0
      %966 = vmatprep.mubr.bf16.mxu0 0
      %967 = vmatmul.mubr.bf16.gmra.mrb[0].mxu0 %v880
      %v968 = vpop.f32.mrb[0].mxu0
      %v969 = vadd.f32 0.0, %v968
      %v970 = vpop.f32.mrb[0].mxu0
      %v971 = vpop.f32.mrb[0].mxu0
      %v972 = vadd.f32 0.0, %v971
      %v973 = vpop.f32.mrb[0].mxu0
      %974 = vdwg.mxu0
      %v975 = vadd.f32 %v838, %v926
      %v976 = vadd.f32 %v839, %v928
      %v977 = vadd.f32 %v840, %v969
      %v978 = vadd.f32 %v841, %v930
      %v979 = vadd.f32 %v842, %v932
      %v980 = vadd.f32 %v843, %v972
      %v981 = vld [vmem:[%s183] sm:$0x3f]
      %s982 = scalar_lea.vmem %s1, 48
      %v983 = vld [vmem:[%s982] sm:$0xf]
      %v984 = vld [vmem:[%s982 + $0x4] sm:$0xf]
      %v987 = vunpack.c.l.b16 %v983
      %v988 = vunpack.c.l.b16 %v984
      %v989 = vpack.c.b16 %v988, %v987
      %v991 = vcombine.high %v981, %v981
      %v993 = vunpack.c.l.s4 1983009808
      %v994 = vunpack.c.0.s8 %v993
      %v995 = vlaneseq
      %v996 = vshrl.u32 %v995, 7
      %v997 = vsub.s32 %v994, %v996
      %v998 = vrot.slane %v981, %v997
      %v1000 = vunpack.c.l.s4 1983009808
      %v1001 = vunpack.c.0.s8 %v1000
      %v1002 = vlaneseq
      %v1003 = vshrl.u32 %v1002, 7
      %v1004 = vsub.s32 %v1001, %v1003
      %v1005 = vrot.slane %v991, %v1004
      %v1006 = vcombine.high %v998, %v998
      %1007 = vrot.lane.b32.xlu0 %v998, 92
      %v1008 = vpop.permute.xlu0 %1007
      %1009 = vrot.lane.b32.xlu0 %v1006, 92
      %v1010 = vpop.permute.xlu0 %1009
      %1011 = vrot.lane.b32.xlu0 %v1005, 92
      %v1012 = vpop.permute.xlu0 %1011
      %vm1013 = vcmask 752640
      %v1014 = vsel %vm1013, %v1008, %v1010
      %v1015 = vsel %vm1013, %v1010, %v1012
      %v1017 = vsel %vm234, %v989, 0
      %v1020 = vsel %vm238, %v1014, 0
      %v1023 = vsel %vm238, %v1015, 0
      %v1026 = vsel %vm238, %v1012, 0
      %1028 = vmatprep.subr.bf16.mxu0 %v1023
      %1029 = vmatpush1.bf16.msra.mxu0 %v1020
      %1030 = vmatprep.subr.bf16.mxu0 0
      %1031 = vmatpush1.bf16.msra.mxu0 0
      %1032 = vmatprep.subr.bf16.mxu0 0
      %1033 = vmatpush1.bf16.msra.mxu0 0
      %1034 = vmatprep.subr.bf16.mxu0 0
      %1035 = vmatpush1.bf16.msra.mxu0 0
      %1036 = vmatprep.subr.bf16.mxu0 0
      %1037 = vmatpush1.bf16.msra.mxu0 0
      %1038 = vmatprep.subr.bf16.mxu0 0
      %1039 = vmatpush1.bf16.msra.mxu0 0
      %1040 = vmatprep.subr.bf16.mxu0 0
      %1041 = vmatpush1.bf16.msra.mxu0 0
      %1042 = vmatprep.subr.bf16.mxu0 0
      %1043 = vmatpush1.bf16.msra.mxu0 0
      %1044 = vmatprep.subr.bf16.mxu0 0
      %1045 = vmatpush1.bf16.msra.mxu0 0
      %1046 = vmatprep.subr.bf16.mxu0 0
      %1047 = vmatpush1.bf16.msra.mxu0 0
      %1048 = vmatprep.subr.bf16.mxu0 0
      %1049 = vmatpush1.bf16.msra.mxu0 0
      %1050 = vmatprep.subr.bf16.mxu0 0
      %1051 = vmatpush1.bf16.msra.mxu0 0
      %1052 = vmatprep.subr.bf16.mxu0 0
      %1053 = vmatpush1.bf16.msra.mxu0 0
      %1054 = vmatprep.subr.bf16.mxu0 0
      %1055 = vmatpush1.bf16.msra.mxu0 0
      %1056 = vmatprep.subr.bf16.mxu0 0
      %1057 = vmatpush1.bf16.msra.mxu0 0
      %1058 = vmatprep.subr.bf16.mxu0 0
      %1059 = vmatpush1.bf16.msra.mxu0 0
      %1060 = vmatprep.mubr.bf16.mxu0 0
      %1061 = vmatmul.mubr.bf16.gmra.mrb[0].mxu0 %v1017
      %v1062 = vpop.f32.mrb[0].mxu0
      %v1063 = vadd.f32 0.0, %v1062
      %v1064 = vpop.f32.mrb[0].mxu0
      %v1065 = vadd.f32 0.0, %v1064
      %v1066 = vpop.f32.mrb[0].mxu0
      %v1067 = vadd.f32 0.0, %v1066
      %v1068 = vpop.f32.mrb[0].mxu0
      %v1069 = vadd.f32 0.0, %v1068
      %1070 = vdwg.mxu0
      %1071 = vmatprep.subr.bf16.mxu0 0
      %1072 = vmatpush1.bf16.msra.mxu0 %v1026
      %1073 = vmatprep.subr.bf16.mxu0 0
      %1074 = vmatpush1.bf16.msra.mxu0 0
      %1075 = vmatprep.subr.bf16.mxu0 0
      %1076 = vmatpush1.bf16.msra.mxu0 0
      %1077 = vmatprep.subr.bf16.mxu0 0
      %1078 = vmatpush1.bf16.msra.mxu0 0
      %1079 = vmatprep.subr.bf16.mxu0 0
      %1080 = vmatpush1.bf16.msra.mxu0 0
      %1081 = vmatprep.subr.bf16.mxu0 0
      %1082 = vmatpush1.bf16.msra.mxu0 0
      %1083 = vmatprep.subr.bf16.mxu0 0
      %1084 = vmatpush1.bf16.msra.mxu0 0
      %1085 = vmatprep.subr.bf16.mxu0 0
      %1086 = vmatpush1.bf16.msra.mxu0 0
      %1087 = vmatprep.subr.bf16.mxu0 0
      %1088 = vmatpush1.bf16.msra.mxu0 0
      %1089 = vmatprep.subr.bf16.mxu0 0
      %1090 = vmatpush1.bf16.msra.mxu0 0
      %1091 = vmatprep.subr.bf16.mxu0 0
      %1092 = vmatpush1.bf16.msra.mxu0 0
      %1093 = vmatprep.subr.bf16.mxu0 0
      %1094 = vmatpush1.bf16.msra.mxu0 0
      %1095 = vmatprep.subr.bf16.mxu0 0
      %1096 = vmatpush1.bf16.msra.mxu0 0
      %1097 = vmatprep.subr.bf16.mxu0 0
      %1098 = vmatpush1.bf16.msra.mxu0 0
      %1099 = vmatprep.subr.bf16.mxu0 0
      %1100 = vmatpush1.bf16.msra.mxu0 0
      %1101 = vmatprep.subr.bf16.mxu0 0
      %1102 = vmatpush1.bf16.msra.mxu0 0
      %1103 = vmatprep.mubr.bf16.mxu0 0
      %1104 = vmatmul.mubr.bf16.gmra.mrb[0].mxu0 %v1017
      %v1105 = vpop.f32.mrb[0].mxu0
      %v1106 = vadd.f32 0.0, %v1105
      %v1107 = vpop.f32.mrb[0].mxu0
      %v1108 = vpop.f32.mrb[0].mxu0
      %v1109 = vadd.f32 0.0, %v1108
      %v1110 = vpop.f32.mrb[0].mxu0
      %1111 = vdwg.mxu0
      %v1112 = vadd.f32 %v975, %v1063
      %v1113 = vadd.f32 %v976, %v1065
      %v1114 = vadd.f32 %v977, %v1106
      %v1115 = vadd.f32 %v978, %v1067
      %v1116 = vadd.f32 %v979, %v1069
      %v1117 = vadd.f32 %v980, %v1109
      %v1118 = vld [vmem:[%s183] sm:$0x3f]
      %s1119 = scalar_lea.vmem %s1, 56
      %v1120 = vld [vmem:[%s1119] sm:$0xf]
      %v1121 = vld [vmem:[%s1119 + $0x4] sm:$0xf]
      %v1124 = vunpack.c.l.b16 %v1120
      %v1125 = vunpack.c.l.b16 %v1121
      %v1126 = vpack.c.b16 %v1125, %v1124
      %v1128 = vcombine.high %v1118, %v1118
      %v1130 = vunpack.c.l.s4 1983009808
      %v1131 = vunpack.c.0.s8 %v1130
      %v1132 = vlaneseq
      %v1133 = vshrl.u32 %v1132, 7
      %v1134 = vsub.s32 %v1131, %v1133
      %v1135 = vrot.slane %v1118, %v1134
      %v1137 = vunpack.c.l.s4 1983009808
      %v1138 = vunpack.c.0.s8 %v1137
      %v1139 = vlaneseq
      %v1140 = vshrl.u32 %v1139, 7
      %v1141 = vsub.s32 %v1138, %v1140
      %v1142 = vrot.slane %v1128, %v1141
      %v1143 = vcombine.high %v1135, %v1135
      %1144 = vrot.lane.b32.xlu0 %v1135, 91
      %v1145 = vpop.permute.xlu0 %1144
      %1146 = vrot.lane.b32.xlu0 %v1143, 91
      %v1147 = vpop.permute.xlu0 %1146
      %1148 = vrot.lane.b32.xlu0 %v1142, 91
      %v1149 = vpop.permute.xlu0 %1148
      %vm1150 = vcmask 744448
      %v1151 = vsel %vm1150, %v1145, %v1147
      %v1152 = vsel %vm1150, %v1147, %v1149
      %v1154 = vsel %vm234, %v1126, 0
      %v1157 = vsel %vm238, %v1151, 0
      %v1160 = vsel %vm238, %v1152, 0
      %v1163 = vsel %vm238, %v1149, 0
      %1165 = vmatprep.subr.bf16.mxu0 %v1160
      %1166 = vmatpush1.bf16.msra.mxu0 %v1157
      %1167 = vmatprep.subr.bf16.mxu0 0
      %1168 = vmatpush1.bf16.msra.mxu0 0
      %1169 = vmatprep.subr.bf16.mxu0 0
      %1170 = vmatpush1.bf16.msra.mxu0 0
      %1171 = vmatprep.subr.bf16.mxu0 0
      %1172 = vmatpush1.bf16.msra.mxu0 0
      %1173 = vmatprep.subr.bf16.mxu0 0
      %1174 = vmatpush1.bf16.msra.mxu0 0
      %1175 = vmatprep.subr.bf16.mxu0 0
      %1176 = vmatpush1.bf16.msra.mxu0 0
      %1177 = vmatprep.subr.bf16.mxu0 0
      %1178 = vmatpush1.bf16.msra.mxu0 0
      %1179 = vmatprep.subr.bf16.mxu0 0
      %1180 = vmatpush1.bf16.msra.mxu0 0
      %1181 = vmatprep.subr.bf16.mxu0 0
      %1182 = vmatpush1.bf16.msra.mxu0 0
      %1183 = vmatprep.subr.bf16.mxu0 0
      %1184 = vmatpush1.bf16.msra.mxu0 0
      %1185 = vmatprep.subr.bf16.mxu0 0
      %1186 = vmatpush1.bf16.msra.mxu0 0
      %1187 = vmatprep.subr.bf16.mxu0 0
      %1188 = vmatpush1.bf16.msra.mxu0 0
      %1189 = vmatprep.subr.bf16.mxu0 0
      %1190 = vmatpush1.bf16.msra.mxu0 0
      %1191 = vmatprep.subr.bf16.mxu0 0
      %1192 = vmatpush1.bf16.msra.mxu0 0
      %1193 = vmatprep.subr.bf16.mxu0 0
      %1194 = vmatpush1.bf16.msra.mxu0 0
      %1195 = vmatprep.subr.bf16.mxu0 0
      %1196 = vmatpush1.bf16.msra.mxu0 0
      %1197 = vmatprep.mubr.bf16.mxu0 0
      %1198 = vmatmul.mubr.bf16.gmra.mrb[0].mxu0 %v1154
      %v1199 = vpop.f32.mrb[0].mxu0
      %v1200 = vadd.f32 0.0, %v1199
      %v1201 = vpop.f32.mrb[0].mxu0
      %v1202 = vadd.f32 0.0, %v1201
      %v1203 = vpop.f32.mrb[0].mxu0
      %v1204 = vadd.f32 0.0, %v1203
      %v1205 = vpop.f32.mrb[0].mxu0
      %v1206 = vadd.f32 0.0, %v1205
      %1207 = vdwg.mxu0
      %1208 = vmatprep.subr.bf16.mxu0 0
      %1209 = vmatpush1.bf16.msra.mxu0 %v1163
      %1210 = vmatprep.subr.bf16.mxu0 0
      %1211 = vmatpush1.bf16.msra.mxu0 0
      %1212 = vmatprep.subr.bf16.mxu0 0
      %1213 = vmatpush1.bf16.msra.mxu0 0
      %1214 = vmatprep.subr.bf16.mxu0 0
      %1215 = vmatpush1.bf16.msra.mxu0 0
      %1216 = vmatprep.subr.bf16.mxu0 0
      %1217 = vmatpush1.bf16.msra.mxu0 0
      %1218 = vmatprep.subr.bf16.mxu0 0
      %1219 = vmatpush1.bf16.msra.mxu0 0
      %1220 = vmatprep.subr.bf16.mxu0 0
      %1221 = vmatpush1.bf16.msra.mxu0 0
      %1222 = vmatprep.subr.bf16.mxu0 0
      %1223 = vmatpush1.bf16.msra.mxu0 0
      %1224 = vmatprep.subr.bf16.mxu0 0
      %1225 = vmatpush1.bf16.msra.mxu0 0
      %1226 = vmatprep.subr.bf16.mxu0 0
      %1227 = vmatpush1.bf16.msra.mxu0 0
      %1228 = vmatprep.subr.bf16.mxu0 0
      %1229 = vmatpush1.bf16.msra.mxu0 0
      %1230 = vmatprep.subr.bf16.mxu0 0
      %1231 = vmatpush1.bf16.msra.mxu0 0
      %1232 = vmatprep.subr.bf16.mxu0 0
      %1233 = vmatpush1.bf16.msra.mxu0 0
      %1234 = vmatprep.subr.bf16.mxu0 0
      %1235 = vmatpush1.bf16.msra.mxu0 0
      %1236 = vmatprep.subr.bf16.mxu0 0
      %1237 = vmatpush1.bf16.msra.mxu0 0
      %1238 = vmatprep.subr.bf16.mxu0 0
      %1239 = vmatpush1.bf16.msra.mxu0 0
      %1240 = vmatprep.mubr.bf16.mxu0 0
      %1241 = vmatmul.mubr.bf16.gmra.mrb[0].mxu0 %v1154
      %v1242 = vpop.f32.mrb[0].mxu0
      %v1243 = vadd.f32 0.0, %v1242
      %v1244 = vpop.f32.mrb[0].mxu0
      %v1245 = vpop.f32.mrb[0].mxu0
      %v1246 = vadd.f32 0.0, %v1245
      %v1247 = vpop.f32.mrb[0].mxu0
      %1248 = vdwg.mxu0
      %v1249 = vadd.f32 %v1112, %v1200
      %v1250 = vadd.f32 %v1113, %v1202
      %v1251 = vadd.f32 %v1114, %v1243
      %v1252 = vadd.f32 %v1115, %v1204
      %v1253 = vadd.f32 %v1116, %v1206
      %v1254 = vadd.f32 %v1117, %v1246
      %v1255 = vld [vmem:[%s183] sm:$0x3f]
      %s1256 = scalar_lea.vmem %s1, 64
      %v1257 = vld [vmem:[%s1256] sm:$0xf]
      %v1258 = vld [vmem:[%s1256 + $0x4] sm:$0xf]
      %v1261 = vunpack.c.l.b16 %v1257
      %v1262 = vunpack.c.l.b16 %v1258
      %v1263 = vpack.c.b16 %v1262, %v1261
      %v1265 = vcombine.high %v1255, %v1255
      %v1267 = vunpack.c.l.s4 1983009808
      %v1268 = vunpack.c.0.s8 %v1267
      %v1269 = vlaneseq
      %v1270 = vshrl.u32 %v1269, 7
      %v1271 = vsub.s32 %v1268, %v1270
      %v1272 = vrot.slane %v1255, %v1271
      %v1274 = vunpack.c.l.s4 1983009808
      %v1275 = vunpack.c.0.s8 %v1274
      %v1276 = vlaneseq
      %v1277 = vshrl.u32 %v1276, 7
      %v1278 = vsub.s32 %v1275, %v1277
      %v1279 = vrot.slane %v1265, %v1278
      %v1280 = vcombine.high %v1272, %v1272
      %1281 = vrot.lane.b32.xlu0 %v1272, 90
      %v1282 = vpop.permute.xlu0 %1281
      %1283 = vrot.lane.b32.xlu0 %v1280, 90
      %v1284 = vpop.permute.xlu0 %1283
      %1285 = vrot.lane.b32.xlu0 %v1279, 90
      %v1286 = vpop.permute.xlu0 %1285
      %vm1287 = vcmask 736256
      %v1288 = vsel %vm1287, %v1282, %v1284
      %v1289 = vsel %vm1287, %v1284, %v1286
      %v1291 = vsel %vm234, %v1263, 0
      %v1294 = vsel %vm238, %v1288, 0
      %v1297 = vsel %vm238, %v1289, 0
      %v1300 = vsel %vm238, %v1286, 0
      %1302 = vmatprep.subr.bf16.mxu0 %v1297
      %1303 = vmatpush1.bf16.msra.mxu0 %v1294
      %1304 = vmatprep.subr.bf16.mxu0 0
      %1305 = vmatpush1.bf16.msra.mxu0 0
      %1306 = vmatprep.subr.bf16.mxu0 0
      %1307 = vmatpush1.bf16.msra.mxu0 0
      %1308 = vmatprep.subr.bf16.mxu0 0
      %1309 = vmatpush1.bf16.msra.mxu0 0
      %1310 = vmatprep.subr.bf16.mxu0 0
      %1311 = vmatpush1.bf16.msra.mxu0 0
      %1312 = vmatprep.subr.bf16.mxu0 0
      %1313 = vmatpush1.bf16.msra.mxu0 0
      %1314 = vmatprep.subr.bf16.mxu0 0
      %1315 = vmatpush1.bf16.msra.mxu0 0
      %1316 = vmatprep.subr.bf16.mxu0 0
      %1317 = vmatpush1.bf16.msra.mxu0 0
      %1318 = vmatprep.subr.bf16.mxu0 0
      %1319 = vmatpush1.bf16.msra.mxu0 0
      %1320 = vmatprep.subr.bf16.mxu0 0
      %1321 = vmatpush1.bf16.msra.mxu0 0
      %1322 = vmatprep.subr.bf16.mxu0 0
      %1323 = vmatpush1.bf16.msra.mxu0 0
      %1324 = vmatprep.subr.bf16.mxu0 0
      %1325 = vmatpush1.bf16.msra.mxu0 0
      %1326 = vmatprep.subr.bf16.mxu0 0
      %1327 = vmatpush1.bf16.msra.mxu0 0
      %1328 = vmatprep.subr.bf16.mxu0 0
      %1329 = vmatpush1.bf16.msra.mxu0 0
      %1330 = vmatprep.subr.bf16.mxu0 0
      %1331 = vmatpush1.bf16.msra.mxu0 0
      %1332 = vmatprep.subr.bf16.mxu0 0
      %1333 = vmatpush1.bf16.msra.mxu0 0
      %1334 = vmatprep.mubr.bf16.mxu0 0
      %1335 = vmatmul.mubr.bf16.gmra.mrb[0].mxu0 %v1291
      %v1336 = vpop.f32.mrb[0].mxu0
      %v1337 = vadd.f32 0.0, %v1336
      %v1338 = vpop.f32.mrb[0].mxu0
      %v1339 = vadd.f32 0.0, %v1338
      %v1340 = vpop.f32.mrb[0].mxu0
      %v1341 = vadd.f32 0.0, %v1340
      %v1342 = vpop.f32.mrb[0].mxu0
      %v1343 = vadd.f32 0.0, %v1342
      %1344 = vdwg.mxu0
      %1345 = vmatprep.subr.bf16.mxu0 0
      %1346 = vmatpush1.bf16.msra.mxu0 %v1300
      %1347 = vmatprep.subr.bf16.mxu0 0
      %1348 = vmatpush1.bf16.msra.mxu0 0
      %1349 = vmatprep.subr.bf16.mxu0 0
      %1350 = vmatpush1.bf16.msra.mxu0 0
      %1351 = vmatprep.subr.bf16.mxu0 0
      %1352 = vmatpush1.bf16.msra.mxu0 0
      %1353 = vmatprep.subr.bf16.mxu0 0
      %1354 = vmatpush1.bf16.msra.mxu0 0
      %1355 = vmatprep.subr.bf16.mxu0 0
      %1356 = vmatpush1.bf16.msra.mxu0 0
      %1357 = vmatprep.subr.bf16.mxu0 0
      %1358 = vmatpush1.bf16.msra.mxu0 0
      %1359 = vmatprep.subr.bf16.mxu0 0
      %1360 = vmatpush1.bf16.msra.mxu0 0
      %1361 = vmatprep.subr.bf16.mxu0 0
      %1362 = vmatpush1.bf16.msra.mxu0 0
      %1363 = vmatprep.subr.bf16.mxu0 0
      %1364 = vmatpush1.bf16.msra.mxu0 0
      %1365 = vmatprep.subr.bf16.mxu0 0
      %1366 = vmatpush1.bf16.msra.mxu0 0
      %1367 = vmatprep.subr.bf16.mxu0 0
      %1368 = vmatpush1.bf16.msra.mxu0 0
      %1369 = vmatprep.subr.bf16.mxu0 0
      %1370 = vmatpush1.bf16.msra.mxu0 0
      %1371 = vmatprep.subr.bf16.mxu0 0
      %1372 = vmatpush1.bf16.msra.mxu0 0
      %1373 = vmatprep.subr.bf16.mxu0 0
      %1374 = vmatpush1.bf16.msra.mxu0 0
      %1375 = vmatprep.subr.bf16.mxu0 0
      %1376 = vmatpush1.bf16.msra.mxu0 0
      %1377 = vmatprep.mubr.bf16.mxu0 0
      %1378 = vmatmul.mubr.bf16.gmra.mrb[0].mxu0 %v1291
      %v1379 = vpop.f32.mrb[0].mxu0
      %v1380 = vadd.f32 0.0, %v1379
      %v1381 = vpop.f32.mrb[0].mxu0
      %v1382 = vpop.f32.mrb[0].mxu0
      %v1383 = vadd.f32 0.0, %v1382
      %v1384 = vpop.f32.mrb[0].mxu0
      %1385 = vdwg.mxu0
      %v1386 = vadd.f32 %v1249, %v1337
      %v1387 = vadd.f32 %v1250, %v1339
      %v1388 = vadd.f32 %v1251, %v1380
      %v1389 = vadd.f32 %v1252, %v1341
      %v1390 = vadd.f32 %v1253, %v1343
      %v1391 = vadd.f32 %v1254, %v1383
      %1393 = vset.pattern.permute.xlu0 0
      %1394 = vperm.xlu0 %1393, %v195
      %v1395 = vpop.permute.xlu0 %1394
      %1398 = vset.pattern.permute.xlu0 0
      %1399 = vperm.xlu0 %1398, %v196
      %v1400 = vpop.permute.xlu0 %1399
      %v1402 = vadd.f32 %v1386, %v1395
      %v1403 = vadd.f32 %v1387, %v1395
      %v1404 = vadd.f32 %v1388, %v1395
      %v1405 = vadd.f32 %v1389, %v1400
      %v1406 = vadd.f32 %v1390, %v1400
      %v1407 = vadd.f32 %v1391, %v1400
      %1408 = vst [vmem:[%s192] sm:$0xff] %v1402
      %1409 = vst [vmem:[%s192 + $0x8] sm:$0xff] %v1403
      %vm1410 = vcmask 261120
      %1411 = vst.msk [vmem:[%s192 + $0x10] sm:$0xff] %vm1410, %v1404
      %1412 = vst [vmem:[%s192 + $0x18] sm:$0xff] %v1405
      %1413 = vst [vmem:[%s192 + $0x20] sm:$0xff] %v1406
      %1414 = vst.msk [vmem:[%s192 + $0x28] sm:$0xff] %vm1410, %v1407
      %s1415 = smul.u32 3, %s19
      %p1416 = scmp.lt.s32.totalorder %s18, 1
      %s1417 = scalar_select %p1416, %s18, 1
      %p1418 = scmp.lt.s32.totalorder %s1415, 2
      %s1419 = scalar_select %p1418, %s1415, 2
      %s1420 = smul.addr %s1417, 6
      %s1421 = sadd.s32 %s1419, %s1420
      %s1422 = smul.addr %s1421, 8
      %s1423 = scalar_lea.vmem %s3, %s1422
      // Predicated region
      $region33: #{upsample_block_pallas.1} parent=31 // pred_check
        %p1424 = pneg %p114
      $region34: #{upsample_block_pallas.1} parent=31 // pred_check_branch
        %1426 = sbr.rel (%p1424) target = $region36
      $region35: #{upsample_block_pallas.1} parent=31 // pred_region
        %s1427 = smul.u32 3, %s19
      $region36: #{upsample_block_pallas.1} parent=31 // pred_fallthru
        _
    $region32: #{upsample_block_pallas.1} parent=5 // pred_fallthru
      _
    %p1428 = scmp.le.s32.totalorder 2, %s9
    // Predicated region
    $region37: #{upsample_block_pallas.1} parent=5 // pred_check
      %p1429 = pneg %p1428
    $region38: #{upsample_block_pallas.1} parent=5 // pred_check_branch
      %1431 = sbr.rel (%p1429) target = $region40
    $region39: #{upsample_block_pallas.1} parent=5 // pred_region
      %s1432 = ssub.s32 %s9, 2
      // Predicated region
      $region41: #{upsample_block_pallas.1} parent=39 // pred_check
        %p1433 = pneg %p120
      $region42: #{upsample_block_pallas.1} parent=39 // pred_check_branch
        %1435 = sbr.rel (%p1433) target = $region44
      $region43: #{upsample_block_pallas.1} parent=39 // pred_region
        %s1436 = smul.u32 3, %s21
        %p1437 = scmp.lt.s32.totalorder %s20, 1
        %s1438 = scalar_select %p1437, %s20, 1
        %p1439 = scmp.lt.s32.totalorder %s1436, 2
        %s1440 = scalar_select %p1439, %s1436, 2
        %s1441 = smul.addr %s1438, 6
        %s1442 = sadd.s32 %s1440, %s1441
        %s1443 = smul.addr %s1442, 8
        %s1444 = scalar_lea.vmem %s3, %s1443
      $region44: #{upsample_block_pallas.1} parent=39 // pred_fallthru
        _
    $region40: #{upsample_block_pallas.1} parent=5 // pred_fallthru
      _
  $region6: #{upsample_block_pallas.1} parent=0 // loop_footer
    %s13 = sadd.s32 1, %s9
  $region7: #{upsample_block_pallas.1} parent=0 // loop_footer_branch
    %8 = sbr.rel target = $region3
  $region8: #{upsample_block_pallas.1} parent=0 // loop_exit
    _

</llo_original>
